<compile_context>
chip_gen: v7x
topology: tpu7x:2x2x1
jax: 0.10.0
libtpu: 0.0.40
codegen_flags: <defaults>
</compile_context>

<pallas_src>
import functools
import numpy as np
import jax
import jax.numpy as jnp
from jax import lax
from jax.experimental import pallas as pl
from jax.experimental.pallas import tpu as pltpu

_COS_EPS = 1e-8    # torch F.cosine_similarity default eps
_ATTN_EPS = 1e-11  # epsilon added to the returned attentions in the reference
_NUM_TPS = 5


def _cosine(dot, ssa, ssb):
    """torch.F.cosine_similarity: dot * rsqrt(max(||a||^2 * ||b||^2, eps^2))."""
    return dot * lax.rsqrt(jnp.maximum(ssa * ssb, _COS_EPS * _COS_EPS))


def _summer_kernel(se_ref, wl_ref, wr_ref, awt_ref, fw3_ref, scal_ref,
                   y_ref, attn_ref, u_ref, *, inv_temperature, d):
    se = se_ref[...]                                        # (N, D) script embeddings
    n = se.shape[0]
    pu = u_ref.shape[1]                                     # padded width of u

    # --- sliding-window left/right contexts as exact (N,N) averaging matmuls ---
    # TODO(synk): swap for an in-kernel prefix-sum window mean if N scales to
    # thousands (O(N^2) VMEM/HBM otherwise).
    lctx = jnp.dot(wl_ref[...], se, preferred_element_type=jnp.float32)
    rctx = jnp.dot(wr_ref[...], se, preferred_element_type=jnp.float32)

    se_sq = jnp.sum(se * se, axis=-1, keepdims=True)
    l_sq = jnp.sum(lctx * lctx, axis=-1, keepdims=True)
    r_sq = jnp.sum(rctx * rctx, axis=-1, keepdims=True)
    cos_l = _cosine(jnp.sum(se * lctx, axis=-1, keepdims=True), se_sq, l_sq)
    cos_r = _cosine(jnp.sum(se * rctx, axis=-1, keepdims=True), se_sq, r_sq)

    # --- build u in the lane-aligned padded layout (N, PU) --------------------
    # nine D-wide blocks, then the two cosine columns, then zero padding.
    pad_w = pu - (9 * d + 2)
    if pad_w > 0:
        u_ref[:, 9 * d + 2:] = jnp.zeros((n, pad_w), jnp.float32)
    u_ref[:, 0 * d:1 * d] = se
    u_ref[:, 1 * d:2 * d] = se
    u_ref[:, 2 * d:3 * d] = lctx
    u_ref[:, 3 * d:4 * d] = lctx * se
    u_ref[:, 4 * d:5 * d] = lctx - se
    u_ref[:, 5 * d:6 * d] = se
    u_ref[:, 6 * d:7 * d] = rctx
    u_ref[:, 7 * d:8 * d] = rctx * se
    u_ref[:, 8 * d:9 * d] = rctx - se
    u_ref[:, 9 * d:9 * d + 1] = cos_l
    u_ref[:, 9 * d + 1:9 * d + 2] = cos_r
    u = u_ref[...]                                          # (N, PU)

    # --- five prediction heads fused into one matmul, directly in (5, N) ------
    # head biases cancel in the softmax over scenes and are dropped.
    energies_t = lax.dot_general(awt_ref[...], u, (((1,), (1,)), ((), ())),
                                 preferred_element_type=jnp.float32)   # (5, N)
    z = energies_t * inv_temperature
    z = z - jnp.max(z, axis=-1, keepdims=True)              # softmax over scenes
    ez = jnp.exp(z)
    attn_t = ez / jnp.sum(ez, axis=-1, keepdims=True)       # (5, N)
    attn_ref[...] = attn_t + _ATTN_EPS                      # eps only on the output

    # --- turning-point embeddings: mean_n attn[h,n] * u[n]  -> (5, PU) --------
    tps = jnp.dot(attn_t, u, preferred_element_type=jnp.float32) * (1.0 / n)

    # --- scene/TP interactions: elementwise max over the 5 TPs ---------------
    # three running maxima, norms & dot products hoisted out of the loop.
    u_sq = jnp.sum(u * u, axis=-1, keepdims=True)                       # (N, 1)
    tps_sq = jnp.sum(tps * tps, axis=-1, keepdims=True)                 # (5, 1)
    dots = lax.dot_general(u, tps, (((1,), (1,)), ((), ())),
                           preferred_element_type=jnp.float32)          # (N, 5)

    mp = md = mc = None
    for h in range(_NUM_TPS):
        ctx = tps[h:h + 1, :]                                           # (1, PU)
        prod = ctx * u
        diff = ctx - u
        cos_h = _cosine(dots[:, h:h + 1], u_sq, tps_sq[h:h + 1, :])     # (N, 1)
        if h == 0:
            mp, md, mc = prod, diff, cos_h
        else:
            mp = jnp.maximum(mp, prod)
            md = jnp.maximum(md, diff)
            mc = jnp.maximum(mc, cos_h)

    # --- final Linear(final_size, 1) on the VPU --------------------------------
    # fw3 row0 = product-block weights, row1 = diff-block weights,
    # row2 = script-embedding weights (u[:, :D] == se); scal = [w_cos, bias].
    fw = fw3_ref[...]                                                   # (3, PU)
    contrib = mp * fw[0:1, :] + md * fw[1:2, :] + u * fw[2:3, :]
    y = (jnp.sum(contrib, axis=-1, keepdims=True)
         + mc * scal_ref[0] + scal_ref[1])                              # (N, 1)
    y_ref[...] = y


def pack_parameters(attn_w, attn_b, final_w, final_b, script_size):
    """Permute / zero-pad the original-layout weights into the kernel's
    lane-aligned padded-u layout.

    attn_w: (A, 5)  column h = prediction head h weight vector (A = 9*D + 2)
    final_w: (F, 1) with F = 2*A + 1 + D, laid out [prod | diff | cos | se]
    attn_b is dropped: constant along the softmax (scene) axis -> cancels.
    """
    d = script_size
    a = 9 * d + 2
    pu = ((a + 127) // 128) * 128
    del attn_b
    # padded-u position -> original u column
    perm = np.concatenate([np.arange(0, 5 * d),
                           np.arange(5 * d + 1, 9 * d + 1),
                           np.array([5 * d, 9 * d + 1])]).astype(np.int64)
    attn_w = np.asarray(attn_w, np.float32)
    final_w = np.asarray(final_w, np.float32).reshape(-1)

    awt = np.zeros((_NUM_TPS, pu), np.float32)
    awt[:, :a] = attn_w[perm, :].T

    fw3 = np.zeros((3, pu), np.float32)
    fw3[0, :a] = final_w[perm]                      # max-product block
    fw3[1, :a] = final_w[a + perm]                  # max-diff block
    fw3[2, :d] = final_w[2 * a + 1:2 * a + 1 + d]   # script-embedding block
    scal = np.array([final_w[2 * a],
                     float(np.asarray(final_b).reshape(-1)[0])], np.float32)
    return jnp.asarray(awt), jnp.asarray(fw3), jnp.asarray(scal), pu


def summer_supervised_forward(script_embeddings, wl, wr, attn_w, attn_b,
                              final_w, final_b, temperature):
    n, d = script_embeddings.shape
    awt, fw3, scal, pu = pack_parameters(attn_w, attn_b, final_w, final_b, d)
    kernel = functools.partial(_summer_kernel,
                               inv_temperature=float(1.0 / temperature), d=d)
    vmem = pl.BlockSpec(memory_space=pltpu.MemorySpace.VMEM)
    smem = pl.BlockSpec(memory_space=pltpu.MemorySpace.SMEM)
    y, attn = pl.pallas_call(
        kernel,
        out_shape=(jax.ShapeDtypeStruct((n, 1), jnp.float32),
                   jax.ShapeDtypeStruct((_NUM_TPS, n), jnp.float32)),
        in_specs=[vmem, vmem, vmem, vmem, vmem, smem],
        out_specs=(vmem, vmem),
        scratch_shapes=[pltpu.VMEM((n, pu), jnp.float32)],
    )(script_embeddings, wl, wr, awt, fw3, scal)
    # attn is already (5, num_scenes); no post-kernel transpose.
    return y[:, 0], attn


def build_context_matrices(num_scenes, window_length):
    """Row-stochastic matrices reproducing the left/right windowed means."""
    w = int(window_length * num_scenes)
    if w <= 0:
        raise ValueError("int(window_length * num_scenes) must be >= 1")
    wl = np.zeros((num_scenes, num_scenes), np.float32)
    wr = np.zeros((num_scenes, num_scenes), np.float32)
    for i in range(num_scenes):
        if i == 0:
            pass                                   # zero left context
        elif i < w:
            wl[i, 0:i] = 1.0 / i
        else:
            wl[i, i - w:i] = 1.0 / w
        if i == num_scenes - 1:
            pass                                   # zero right context
        elif i > num_scenes - 1 - w:
            wr[i, i:num_scenes] = 1.0 / (num_scenes - i)
        else:
            wr[i, i:i + w] = 1.0 / w
    return jnp.asarray(wl), jnp.asarray(wr)


# TODO(synk): pretrained_model.{scene_encoder, scene_attention, script_encoder,
# prediction_1..5} are external pretrained RNN/attention modules not defined in
# the reference; the encoders are replaced by deterministic linear + masked
# attention proxies (plain-JAX glue), the prediction heads by Linear(A, 1).
def encode_script(script, scene_lens, params):
    outs = jnp.tanh(jnp.einsum('nse,eh->nsh', script, params['w_scene']))
    e = jnp.einsum('nsh,h->ns', outs, params['v_attn'])
    mask = jnp.arange(script.shape[1])[None, :] < scene_lens[:, None]
    e = jnp.where(mask, e, -1e30)
    sa = jax.nn.softmax(e, axis=-1)
    scene_emb = jnp.einsum('ns,nsh->nh', sa, outs)
    script_embeddings = jnp.tanh(scene_emb @ params['w_script'])
    return script_embeddings                        # (num_scenes, script_size)


if __name__ == "__main__":
    # config: scene/script encoder size 16, both bidirectional -> 32 features
    scene_size = 16 * 2
    script_size = 16 * 2
    window_length = 0.25
    temperature = 1.0

    num_scenes, num_sents, emb = 8, 6, 16
    attention_size = (script_size * 4 + 1) * 2 + script_size     # 290
    final_size = script_size + (attention_size * 2 + 1)          # 613

    key = jax.random.PRNGKey(0)
    ks = jax.random.split(key, 8)
    scale = 0.05
    script = jax.random.normal(ks[0], (num_scenes, num_sents, emb), jnp.float32)
    scene_lens = jnp.array([6, 4, 5, 3, 6, 2, 5, 4], jnp.int32)

    params = {
        'w_scene': scale * jax.random.normal(ks[1], (emb, scene_size), jnp.float32),
        'v_attn': scale * jax.random.normal(ks[2], (scene_size,), jnp.float32),
        'w_script': scale * jax.random.normal(ks[3], (scene_size, script_size), jnp.float32),
    }
    attn_w = scale * jax.random.normal(ks[4], (attention_size, _NUM_TPS), jnp.float32)
    attn_b = scale * jax.random.normal(ks[5], (1, _NUM_TPS), jnp.float32)
    final_w = scale * jax.random.normal(ks[6], (final_size, 1), jnp.float32)
    final_b = scale * jax.random.normal(ks[7], (1, 1), jnp.float32)

    # plain-JAX glue: pretrained encoders (proxies)
    script_embeddings = encode_script(script, scene_lens, params)   # (8, 32)
    wl, wr = build_context_matrices(num_scenes, window_length)

    # Pallas kernel: the defined forward-pass hot path
    y, attentions = summer_supervised_forward(
        script_embeddings, wl, wr, attn_w, attn_b, final_w, final_b, temperature)
    y = jax.block_until_ready(y)
    attentions = jax.block_until_ready(attentions)

    assert y.shape == (num_scenes,)
    assert attentions.shape == (_NUM_TPS, num_scenes)
    assert bool(jnp.all(jnp.isfinite(y))) and bool(jnp.all(jnp.isfinite(attentions)))
    # attentions rows are softmaxes over scenes (+eps)
    assert bool(jnp.all(jnp.abs(jnp.sum(attentions, axis=-1) - 1.0) < 1e-3))
    print("KERNEL_OK")
</pallas_src>

<mosaic_0001>
module attributes {stable_mosaic.version = 11 : i64} {
  func.func @_summer_kernel(%arg0: memref<8x32xf32, #tpu.memory_space<vmem>>, %arg1: memref<8x8xf32, #tpu.memory_space<vmem>>, %arg2: memref<8x8xf32, #tpu.memory_space<vmem>>, %arg3: memref<5x384xf32, #tpu.memory_space<vmem>>, %arg4: memref<3x384xf32, #tpu.memory_space<vmem>>, %arg5: memref<2xf32, #tpu.memory_space<smem>>, %arg6: memref<8x1xf32, #tpu.memory_space<vmem>>, %arg7: memref<5x8xf32, #tpu.memory_space<vmem>>, %arg8: memref<8x384xf32, #tpu.memory_space<vmem>>) attributes {dimension_semantics = [], scalar_prefetch = 0 : i64, scratch_operands = 1 : i64, tpu.core_type = #tpu.core_type<tc>} {
    %c0 = arith.constant 0 : index
    %c0_0 = arith.constant 0 : index
    %0 = vector.load %arg0[%c0, %c0_0] : memref<8x32xf32, #tpu.memory_space<vmem>>, vector<8x32xf32>
    %c0_1 = arith.constant 0 : index
    %c0_2 = arith.constant 0 : index
    %1 = vector.load %arg1[%c0_1, %c0_2] : memref<8x8xf32, #tpu.memory_space<vmem>>, vector<8x8xf32>
    %cst = arith.constant dense<0.000000e+00> : vector<8x32xf32>
    %2 = tpu.matmul %1, %0, %cst {dimension_numbers = #tpu.dot_dimension_numbers<[1], [0], [0], [1], [0, 0, 1, 1], [], []>} : vector<8x8xf32>, vector<8x32xf32>, vector<8x32xf32> -> vector<8x32xf32>
    %c0_3 = arith.constant 0 : index
    %c0_4 = arith.constant 0 : index
    %3 = vector.load %arg2[%c0_3, %c0_4] : memref<8x8xf32, #tpu.memory_space<vmem>>, vector<8x8xf32>
    %cst_5 = arith.constant dense<0.000000e+00> : vector<8x32xf32>
    %4 = tpu.matmul %3, %0, %cst_5 {dimension_numbers = #tpu.dot_dimension_numbers<[1], [0], [0], [1], [0, 0, 1, 1], [], []>} : vector<8x8xf32>, vector<8x32xf32>, vector<8x32xf32> -> vector<8x32xf32>
    %5 = arith.mulf %0, %0 : vector<8x32xf32>
    %cst_6 = arith.constant dense<0.000000e+00> : vector<8xf32>
    %6 = vector.multi_reduction <add>, %5, %cst_6 [1] : vector<8x32xf32> to vector<8xf32>
    %7 = vector.shape_cast %6 : vector<8xf32> to vector<8x1xf32>
    %8 = arith.mulf %2, %2 : vector<8x32xf32>
    %cst_7 = arith.constant dense<0.000000e+00> : vector<8xf32>
    %9 = vector.multi_reduction <add>, %8, %cst_7 [1] : vector<8x32xf32> to vector<8xf32>
    %10 = vector.shape_cast %9 : vector<8xf32> to vector<8x1xf32>
    %11 = arith.mulf %4, %4 : vector<8x32xf32>
    %cst_8 = arith.constant dense<0.000000e+00> : vector<8xf32>
    %12 = vector.multi_reduction <add>, %11, %cst_8 [1] : vector<8x32xf32> to vector<8xf32>
    %13 = vector.shape_cast %12 : vector<8xf32> to vector<8x1xf32>
    %14 = arith.mulf %0, %2 : vector<8x32xf32>
    %cst_9 = arith.constant dense<0.000000e+00> : vector<8xf32>
    %15 = vector.multi_reduction <add>, %14, %cst_9 [1] : vector<8x32xf32> to vector<8xf32>
    %16 = vector.shape_cast %15 : vector<8xf32> to vector<8x1xf32>
    %17 = arith.mulf %7, %10 : vector<8x1xf32>
    %cst_10 = arith.constant 1.000000e-16 : f32
    %18 = vector.broadcast %cst_10 : f32 to vector<8x1xf32>
    %19 = arith.maximumf %17, %18 : vector<8x1xf32>
    %20 = math.rsqrt %19 : vector<8x1xf32>
    %21 = arith.mulf %16, %20 : vector<8x1xf32>
    %22 = arith.mulf %0, %4 : vector<8x32xf32>
    %cst_11 = arith.constant dense<0.000000e+00> : vector<8xf32>
    %23 = vector.multi_reduction <add>, %22, %cst_11 [1] : vector<8x32xf32> to vector<8xf32>
    %24 = vector.shape_cast %23 : vector<8xf32> to vector<8x1xf32>
    %25 = arith.mulf %7, %13 : vector<8x1xf32>
    %cst_12 = arith.constant 1.000000e-16 : f32
    %26 = vector.broadcast %cst_12 : f32 to vector<8x1xf32>
    %27 = arith.maximumf %25, %26 : vector<8x1xf32>
    %28 = math.rsqrt %27 : vector<8x1xf32>
    %29 = arith.mulf %24, %28 : vector<8x1xf32>
    %cst_13 = arith.constant 0.000000e+00 : f32
    %30 = vector.broadcast %cst_13 : f32 to vector<8x94xf32>
    %c0_14 = arith.constant 0 : index
    %c290 = arith.constant 290 : index
    %31 = vector.load %arg8[%c0_14, %c290] : memref<8x384xf32, #tpu.memory_space<vmem>>, vector<8x94xf32>
    tpu.vector_store %arg8[%c0_14, %c290], %30 {strides = array<i32>} : memref<8x384xf32, #tpu.memory_space<vmem>>, vector<8x94xf32>,
    %c0_15 = arith.constant 0 : index
    %c0_16 = arith.constant 0 : index
    %32 = vector.load %arg8[%c0_15, %c0_16] : memref<8x384xf32, #tpu.memory_space<vmem>>, vector<8x32xf32>
    tpu.vector_store %arg8[%c0_15, %c0_16], %0 {strides = array<i32>} : memref<8x384xf32, #tpu.memory_space<vmem>>, vector<8x32xf32>,
    %c0_17 = arith.constant 0 : index
    %c32 = arith.constant 32 : index
    %33 = vector.load %arg8[%c0_17, %c32] : memref<8x384xf32, #tpu.memory_space<vmem>>, vector<8x32xf32>
    tpu.vector_store %arg8[%c0_17, %c32], %0 {strides = array<i32>} : memref<8x384xf32, #tpu.memory_space<vmem>>, vector<8x32xf32>,
    %c0_18 = arith.constant 0 : index
    %c64 = arith.constant 64 : index
    %34 = vector.load %arg8[%c0_18, %c64] : memref<8x384xf32, #tpu.memory_space<vmem>>, vector<8x32xf32>
    tpu.vector_store %arg8[%c0_18, %c64], %2 {strides = array<i32>} : memref<8x384xf32, #tpu.memory_space<vmem>>, vector<8x32xf32>,
    %35 = arith.mulf %2, %0 : vector<8x32xf32>
    %c0_19 = arith.constant 0 : index
    %c96 = arith.constant 96 : index
    %36 = vector.load %arg8[%c0_19, %c96] : memref<8x384xf32, #tpu.memory_space<vmem>>, vector<8x32xf32>
    tpu.vector_store %arg8[%c0_19, %c96], %35 {strides = array<i32>} : memref<8x384xf32, #tpu.memory_space<vmem>>, vector<8x32xf32>,
    %37 = arith.subf %2, %0 : vector<8x32xf32>
    %c0_20 = arith.constant 0 : index
    %c128 = arith.constant 128 : index
    %38 = vector.load %arg8[%c0_20, %c128] : memref<8x384xf32, #tpu.memory_space<vmem>>, vector<8x32xf32>
    tpu.vector_store %arg8[%c0_20, %c128], %37 {strides = array<i32>} : memref<8x384xf32, #tpu.memory_space<vmem>>, vector<8x32xf32>,
    %c0_21 = arith.constant 0 : index
    %c160 = arith.constant 160 : index
    %39 = vector.load %arg8[%c0_21, %c160] : memref<8x384xf32, #tpu.memory_space<vmem>>, vector<8x32xf32>
    tpu.vector_store %arg8[%c0_21, %c160], %0 {strides = array<i32>} : memref<8x384xf32, #tpu.memory_space<vmem>>, vector<8x32xf32>,
    %c0_22 = arith.constant 0 : index
    %c192 = arith.constant 192 : index
    %40 = vector.load %arg8[%c0_22, %c192] : memref<8x384xf32, #tpu.memory_space<vmem>>, vector<8x32xf32>
    tpu.vector_store %arg8[%c0_22, %c192], %4 {strides = array<i32>} : memref<8x384xf32, #tpu.memory_space<vmem>>, vector<8x32xf32>,
    %41 = arith.mulf %4, %0 : vector<8x32xf32>
    %c0_23 = arith.constant 0 : index
    %c224 = arith.constant 224 : index
    %42 = vector.load %arg8[%c0_23, %c224] : memref<8x384xf32, #tpu.memory_space<vmem>>, vector<8x32xf32>
    tpu.vector_store %arg8[%c0_23, %c224], %41 {strides = array<i32>} : memref<8x384xf32, #tpu.memory_space<vmem>>, vector<8x32xf32>,
    %43 = arith.subf %4, %0 : vector<8x32xf32>
    %c0_24 = arith.constant 0 : index
    %c256 = arith.constant 256 : index
    %44 = vector.load %arg8[%c0_24, %c256] : memref<8x384xf32, #tpu.memory_space<vmem>>, vector<8x32xf32>
    tpu.vector_store %arg8[%c0_24, %c256], %43 {strides = array<i32>} : memref<8x384xf32, #tpu.memory_space<vmem>>, vector<8x32xf32>,
    %c0_25 = arith.constant 0 : index
    %c288 = arith.constant 288 : index
    %45 = vector.load %arg8[%c0_25, %c288] : memref<8x384xf32, #tpu.memory_space<vmem>>, vector<8x1xf32>
    tpu.vector_store %arg8[%c0_25, %c288], %21 {strides = array<i32>} : memref<8x384xf32, #tpu.memory_space<vmem>>, vector<8x1xf32>,
    %c0_26 = arith.constant 0 : index
    %c289 = arith.constant 289 : index
    %46 = vector.load %arg8[%c0_26, %c289] : memref<8x384xf32, #tpu.memory_space<vmem>>, vector<8x1xf32>
    tpu.vector_store %arg8[%c0_26, %c289], %29 {strides = array<i32>} : memref<8x384xf32, #tpu.memory_space<vmem>>, vector<8x1xf32>,
    %c0_27 = arith.constant 0 : index
    %c0_28 = arith.constant 0 : index
    %47 = vector.load %arg8[%c0_27, %c0_28] : memref<8x384xf32, #tpu.memory_space<vmem>>, vector<8x384xf32>
    %c0_29 = arith.constant 0 : index
    %c0_30 = arith.constant 0 : index
    %48 = vector.load %arg3[%c0_29, %c0_30] : memref<5x384xf32, #tpu.memory_space<vmem>>, vector<5x384xf32>
    %cst_31 = arith.constant dense<0.000000e+00> : vector<5x8xf32>
    %49 = tpu.matmul %48, %47, %cst_31 {dimension_numbers = #tpu.dot_dimension_numbers<[1], [1], [0], [0], [0, 0, 1, 0], [], []>} : vector<5x384xf32>, vector<8x384xf32>, vector<5x8xf32> -> vector<5x8xf32>
    %cst_32 = arith.constant 1.000000e+00 : f32
    %50 = vector.broadcast %cst_32 : f32 to vector<5x8xf32>
    %51 = arith.mulf %49, %50 : vector<5x8xf32>
    %cst_33 = arith.constant dense<0xFF800000> : vector<5xf32>
    %52 = vector.multi_reduction <maximumf>, %51, %cst_33 [1] : vector<5x8xf32> to vector<5xf32>
    %53 = vector.shape_cast %52 : vector<5xf32> to vector<5x1xf32>
    %54 = vector.broadcast %53 : vector<5x1xf32> to vector<5x8xf32>
    %55 = arith.subf %51, %54 : vector<5x8xf32>
    %56 = math.exp %55 : vector<5x8xf32>
    %cst_34 = arith.constant dense<0.000000e+00> : vector<5xf32>
    %57 = vector.multi_reduction <add>, %56, %cst_34 [1] : vector<5x8xf32> to vector<5xf32>
    %58 = vector.shape_cast %57 : vector<5xf32> to vector<5x1xf32>
    %59 = vector.broadcast %58 : vector<5x1xf32> to vector<5x8xf32>
    %60 = arith.divf %56, %59 : vector<5x8xf32>
    %cst_35 = arith.constant 9.99999996E-12 : f32
    %61 = vector.broadcast %cst_35 : f32 to vector<5x8xf32>
    %62 = arith.addf %60, %61 : vector<5x8xf32>
    %c0_36 = arith.constant 0 : index
    %c0_37 = arith.constant 0 : index
    %63 = vector.load %arg7[%c0_36, %c0_37] : memref<5x8xf32, #tpu.memory_space<vmem>>, vector<5x8xf32>
    tpu.vector_store %arg7[%c0_36, %c0_37], %62 {strides = array<i32>} : memref<5x8xf32, #tpu.memory_space<vmem>>, vector<5x8xf32>,
    %cst_38 = arith.constant dense<0.000000e+00> : vector<5x384xf32>
    %64 = tpu.matmul %60, %47, %cst_38 {dimension_numbers = #tpu.dot_dimension_numbers<[1], [0], [0], [1], [0, 0, 1, 1], [], []>} : vector<5x8xf32>, vector<8x384xf32>, vector<5x384xf32> -> vector<5x384xf32>
    %cst_39 = arith.constant 1.250000e-01 : f32
    %65 = vector.broadcast %cst_39 : f32 to vector<5x384xf32>
    %66 = arith.mulf %64, %65 : vector<5x384xf32>
    %67 = arith.mulf %47, %47 : vector<8x384xf32>
    %cst_40 = arith.constant dense<0.000000e+00> : vector<8xf32>
    %68 = vector.multi_reduction <add>, %67, %cst_40 [1] : vector<8x384xf32> to vector<8xf32>
    %69 = vector.shape_cast %68 : vector<8xf32> to vector<8x1xf32>
    %70 = arith.mulf %66, %66 : vector<5x384xf32>
    %cst_41 = arith.constant dense<0.000000e+00> : vector<5xf32>
    %71 = vector.multi_reduction <add>, %70, %cst_41 [1] : vector<5x384xf32> to vector<5xf32>
    %72 = vector.shape_cast %71 : vector<5xf32> to vector<5x1xf32>
    %cst_42 = arith.constant dense<0.000000e+00> : vector<8x5xf32>
    %73 = tpu.matmul %47, %66, %cst_42 {dimension_numbers = #tpu.dot_dimension_numbers<[1], [1], [0], [0], [0, 0, 1, 0], [], []>} : vector<8x384xf32>, vector<5x384xf32>, vector<8x5xf32> -> vector<8x5xf32>
    %74 = vector.extract_strided_slice %66 {offsets = [0, 0], sizes = [1, 384], strides = [1, 1]} : vector<5x384xf32> to vector<1x384xf32>
    %75 = vector.broadcast %74 : vector<1x384xf32> to vector<8x384xf32>
    %76 = arith.mulf %75, %47 : vector<8x384xf32>
    %77 = vector.broadcast %74 : vector<1x384xf32> to vector<8x384xf32>
    %78 = arith.subf %77, %47 : vector<8x384xf32>
    %79 = vector.extract_strided_slice %73 {offsets = [0, 0], sizes = [8, 1], strides = [1, 1]} : vector<8x5xf32> to vector<8x1xf32>
    %80 = vector.extract_strided_slice %72 {offsets = [0, 0], sizes = [1, 1], strides = [1, 1]} : vector<5x1xf32> to vector<1x1xf32>
    %81 = vector.broadcast %80 : vector<1x1xf32> to vector<8x1xf32>
    %82 = arith.mulf %69, %81 : vector<8x1xf32>
    %cst_43 = arith.constant 1.000000e-16 : f32
    %83 = vector.broadcast %cst_43 : f32 to vector<8x1xf32>
    %84 = arith.maximumf %82, %83 : vector<8x1xf32>
    %85 = math.rsqrt %84 : vector<8x1xf32>
    %86 = arith.mulf %79, %85 : vector<8x1xf32>
    %87 = vector.extract_strided_slice %66 {offsets = [1, 0], sizes = [1, 384], strides = [1, 1]} : vector<5x384xf32> to vector<1x384xf32>
    %88 = vector.broadcast %87 : vector<1x384xf32> to vector<8x384xf32>
    %89 = arith.mulf %88, %47 : vector<8x384xf32>
    %90 = vector.broadcast %87 : vector<1x384xf32> to vector<8x384xf32>
    %91 = arith.subf %90, %47 : vector<8x384xf32>
    %92 = vector.extract_strided_slice %73 {offsets = [0, 1], sizes = [8, 1], strides = [1, 1]} : vector<8x5xf32> to vector<8x1xf32>
    %93 = vector.extract_strided_slice %72 {offsets = [1, 0], sizes = [1, 1], strides = [1, 1]} : vector<5x1xf32> to vector<1x1xf32>
    %94 = vector.broadcast %93 : vector<1x1xf32> to vector<8x1xf32>
    %95 = arith.mulf %69, %94 : vector<8x1xf32>
    %cst_44 = arith.constant 1.000000e-16 : f32
    %96 = vector.broadcast %cst_44 : f32 to vector<8x1xf32>
    %97 = arith.maximumf %95, %96 : vector<8x1xf32>
    %98 = math.rsqrt %97 : vector<8x1xf32>
    %99 = arith.mulf %92, %98 : vector<8x1xf32>
    %100 = arith.maximumf %76, %89 : vector<8x384xf32>
    %101 = arith.maximumf %78, %91 : vector<8x384xf32>
    %102 = arith.maximumf %86, %99 : vector<8x1xf32>
    %103 = vector.extract_strided_slice %66 {offsets = [2, 0], sizes = [1, 384], strides = [1, 1]} : vector<5x384xf32> to vector<1x384xf32>
    %104 = vector.broadcast %103 : vector<1x384xf32> to vector<8x384xf32>
    %105 = arith.mulf %104, %47 : vector<8x384xf32>
    %106 = vector.broadcast %103 : vector<1x384xf32> to vector<8x384xf32>
    %107 = arith.subf %106, %47 : vector<8x384xf32>
    %108 = vector.extract_strided_slice %73 {offsets = [0, 2], sizes = [8, 1], strides = [1, 1]} : vector<8x5xf32> to vector<8x1xf32>
    %109 = vector.extract_strided_slice %72 {offsets = [2, 0], sizes = [1, 1], strides = [1, 1]} : vector<5x1xf32> to vector<1x1xf32>
    %110 = vector.broadcast %109 : vector<1x1xf32> to vector<8x1xf32>
    %111 = arith.mulf %69, %110 : vector<8x1xf32>
    %cst_45 = arith.constant 1.000000e-16 : f32
    %112 = vector.broadcast %cst_45 : f32 to vector<8x1xf32>
    %113 = arith.maximumf %111, %112 : vector<8x1xf32>
    %114 = math.rsqrt %113 : vector<8x1xf32>
    %115 = arith.mulf %108, %114 : vector<8x1xf32>
    %116 = arith.maximumf %100, %105 : vector<8x384xf32>
    %117 = arith.maximumf %101, %107 : vector<8x384xf32>
    %118 = arith.maximumf %102, %115 : vector<8x1xf32>
    %119 = vector.extract_strided_slice %66 {offsets = [3, 0], sizes = [1, 384], strides = [1, 1]} : vector<5x384xf32> to vector<1x384xf32>
    %120 = vector.broadcast %119 : vector<1x384xf32> to vector<8x384xf32>
    %121 = arith.mulf %120, %47 : vector<8x384xf32>
    %122 = vector.broadcast %119 : vector<1x384xf32> to vector<8x384xf32>
    %123 = arith.subf %122, %47 : vector<8x384xf32>
    %124 = vector.extract_strided_slice %73 {offsets = [0, 3], sizes = [8, 1], strides = [1, 1]} : vector<8x5xf32> to vector<8x1xf32>
    %125 = vector.extract_strided_slice %72 {offsets = [3, 0], sizes = [1, 1], strides = [1, 1]} : vector<5x1xf32> to vector<1x1xf32>
    %126 = vector.broadcast %125 : vector<1x1xf32> to vector<8x1xf32>
    %127 = arith.mulf %69, %126 : vector<8x1xf32>
    %cst_46 = arith.constant 1.000000e-16 : f32
    %128 = vector.broadcast %cst_46 : f32 to vector<8x1xf32>
    %129 = arith.maximumf %127, %128 : vector<8x1xf32>
    %130 = math.rsqrt %129 : vector<8x1xf32>
    %131 = arith.mulf %124, %130 : vector<8x1xf32>
    %132 = arith.maximumf %116, %121 : vector<8x384xf32>
    %133 = arith.maximumf %117, %123 : vector<8x384xf32>
    %134 = arith.maximumf %118, %131 : vector<8x1xf32>
    %135 = vector.extract_strided_slice %66 {offsets = [4, 0], sizes = [1, 384], strides = [1, 1]} : vector<5x384xf32> to vector<1x384xf32>
    %136 = vector.broadcast %135 : vector<1x384xf32> to vector<8x384xf32>
    %137 = arith.mulf %136, %47 : vector<8x384xf32>
    %138 = vector.broadcast %135 : vector<1x384xf32> to vector<8x384xf32>
    %139 = arith.subf %138, %47 : vector<8x384xf32>
    %140 = vector.extract_strided_slice %73 {offsets = [0, 4], sizes = [8, 1], strides = [1, 1]} : vector<8x5xf32> to vector<8x1xf32>
    %141 = vector.extract_strided_slice %72 {offsets = [4, 0], sizes = [1, 1], strides = [1, 1]} : vector<5x1xf32> to vector<1x1xf32>
    %142 = vector.broadcast %141 : vector<1x1xf32> to vector<8x1xf32>
    %143 = arith.mulf %69, %142 : vector<8x1xf32>
    %cst_47 = arith.constant 1.000000e-16 : f32
    %144 = vector.broadcast %cst_47 : f32 to vector<8x1xf32>
    %145 = arith.maximumf %143, %144 : vector<8x1xf32>
    %146 = math.rsqrt %145 : vector<8x1xf32>
    %147 = arith.mulf %140, %146 : vector<8x1xf32>
    %148 = arith.maximumf %132, %137 : vector<8x384xf32>
    %149 = arith.maximumf %133, %139 : vector<8x384xf32>
    %150 = arith.maximumf %134, %147 : vector<8x1xf32>
    %c0_48 = arith.constant 0 : index
    %c0_49 = arith.constant 0 : index
    %151 = vector.load %arg4[%c0_48, %c0_49] : memref<3x384xf32, #tpu.memory_space<vmem>>, vector<3x384xf32>
    %152 = vector.extract_strided_slice %151 {offsets = [0, 0], sizes = [1, 384], strides = [1, 1]} : vector<3x384xf32> to vector<1x384xf32>
    %153 = vector.broadcast %152 : vector<1x384xf32> to vector<8x384xf32>
    %154 = arith.mulf %148, %153 : vector<8x384xf32>
    %155 = vector.extract_strided_slice %151 {offsets = [1, 0], sizes = [1, 384], strides = [1, 1]} : vector<3x384xf32> to vector<1x384xf32>
    %156 = vector.broadcast %155 : vector<1x384xf32> to vector<8x384xf32>
    %157 = arith.mulf %149, %156 : vector<8x384xf32>
    %158 = arith.addf %154, %157 : vector<8x384xf32>
    %159 = vector.extract_strided_slice %151 {offsets = [2, 0], sizes = [1, 384], strides = [1, 1]} : vector<3x384xf32> to vector<1x384xf32>
    %160 = vector.broadcast %159 : vector<1x384xf32> to vector<8x384xf32>
    %161 = arith.mulf %47, %160 : vector<8x384xf32>
    %162 = arith.addf %158, %161 : vector<8x384xf32>
    %cst_50 = arith.constant dense<0.000000e+00> : vector<8xf32>
    %163 = vector.multi_reduction <add>, %162, %cst_50 [1] : vector<8x384xf32> to vector<8xf32>
    %164 = vector.shape_cast %163 : vector<8xf32> to vector<8x1xf32>
    %c0_51 = arith.constant 0 : index
    %165 = memref.load %arg5[%c0_51] : memref<2xf32, #tpu.memory_space<smem>>
    %166 = vector.broadcast %165 : f32 to vector<8x1xf32>
    %167 = arith.mulf %150, %166 : vector<8x1xf32>
    %168 = arith.addf %164, %167 : vector<8x1xf32>
    %c1 = arith.constant 1 : index
    %169 = memref.load %arg5[%c1] : memref<2xf32, #tpu.memory_space<smem>>
    %170 = vector.broadcast %169 : f32 to vector<8x1xf32>
    %171 = arith.addf %168, %170 : vector<8x1xf32>
    %c0_52 = arith.constant 0 : index
    %c0_53 = arith.constant 0 : index
    %172 = vector.load %arg6[%c0_52, %c0_53] : memref<8x1xf32, #tpu.memory_space<vmem>>, vector<8x1xf32>
    tpu.vector_store %arg6[%c0_52, %c0_53], %171 {strides = array<i32>} : memref<8x1xf32, #tpu.memory_space<vmem>>, vector<8x1xf32>,
    return
  }
}

</mosaic_0001>

<llo_original>
// kernel: tpu_custom_call.1
$region0: #{tpu_custom_call.1}
  #allocation0 [shape = 'u32[]', space=smem, size = 0x4, offset = 0x4, fixed_abs, tag = 'smem constant byte address 0x4 - core index']
  #allocation1 [shape = 'u32[144,128]{1,0:T(1,128)}', space=vmem, size = 0x12000, scoped, tag = 'internal scratch']
  #allocation2 [shape = 'f32[8,384]{1,0:T(8,128)}', space=vmem, size = 0x3000, scoped, tag = 'scratch operand']
  %s0 = inlined_call_operand.hbm [shape: f32[8,32], index: 0, kind: input, shape index: {}]
  %s1 = inlined_call_operand.hbm [shape: f32[8,8], index: 1, kind: input, shape index: {}]
  %s2 = inlined_call_operand.hbm [shape: f32[8,8], index: 2, kind: input, shape index: {}]
  %s3 = inlined_call_operand.hbm [shape: f32[5,384], index: 3, kind: input, shape index: {}]
  %s4 = inlined_call_operand.vmem [shape: f32[3,384], index: 4, kind: input, shape index: {}]
  %s5 = inlined_call_operand.vmem [shape: f32[2], index: 5, kind: input, shape index: {}]
  %s6 = inlined_call_operand.vmem [shape: f32[8,1], index: 6, kind: output, shape index: {0}]
  %s7 = inlined_call_operand.hbm [shape: f32[5,8], index: 7, kind: output, shape index: {1}]
  %8 = xla_tuple %s6, %s7
  %s9 = sld [smem:[#allocation0]]
  $region62: #{tpu_custom_call.1} parent=0
    _
  %s11 = ssub.s32 1, %s9
  %s12 = scalar_select 0, %s11, %s9
  $region1: #{tpu_custom_call.1} parent=0
    #allocation3 [shape = 'u8[4096]{0}', space=vmem, size = 0x1000, scoped, tag = 'input window, operand 0, single buffered']
    #allocation4 [shape = 's32[1]{0}', space=sflag, size = 0x4, scoped, tag = 'scoped memory for tpu_custom_call.1']
    #allocation5 [shape = 's32[1]{0}', space=sflag, size = 0x4, scoped, tag = 'scoped memory for tpu_custom_call.1']
    #allocation6 [shape = 's32[1]{0}', space=sflag, size = 0x4, scoped, tag = 'scoped memory for tpu_custom_call.1']
    #allocation7 [shape = 'u8[4096]{0}', space=vmem, size = 0x1000, scoped, tag = 'input window, operand 1, single buffered']
    #allocation8 [shape = 's32[1]{0}', space=sflag, size = 0x4, scoped, tag = 'scoped memory for tpu_custom_call.1']
    #allocation9 [shape = 'u8[4096]{0}', space=vmem, size = 0x1000, scoped, tag = 'input window, operand 2, single buffered']
    #allocation10 [shape = 'u8[12288]{0}', space=vmem, size = 0x3000, scoped, tag = 'input window, operand 3, single buffered']
    #allocation11 [shape = 's32[1]{0}', space=sflag, size = 0x4, scoped, tag = 'scoped memory for tpu_custom_call.1']
    #allocation12 [shape = 'u8[512]{0}', space=smem, size = 0x200, scoped, tag = 'input window, operand 5, single buffered']
    #allocation13 [shape = 'u8[4096]{0}', space=vmem, size = 0x1000, scoped, tag = 'output window, operand 1, single buffered']
    %13 = vsyncpa [#allocation4], 0
    %14 = vsyncpa [#allocation8], 0
    %15 = vsyncpa [#allocation11], 0
    %16 = vsyncpa [#allocation6], 0
    %17 = vsyncpa [#allocation5], 0
    // Predicated region
    $region2: #{tpu_custom_call.1} parent=1 // pred_check
      _
    $region3: #{tpu_custom_call.1} parent=1 // pred_check_branch
      %19 = sbr.rel (0) target = $region5
    $region4: #{tpu_custom_call.1} parent=1 // pred_region
      %s21 = ssub.s32 128, 128
      %22 = vsyncadd [#allocation4], %s21
      %s24 = sshll.u32 [#allocation3], 4
      %s25 = int_to_ptr.vmem [resolvable:$true] %s24
      %27 = dma.hbm_to_vmem [thread:$0]  %s0, 128, %s25, [#allocation4]
    $region5: #{tpu_custom_call.1} parent=1 // pred_fallthru
      _
    // Predicated region
    $region6: #{tpu_custom_call.1} parent=1 // pred_check
      _
    $region7: #{tpu_custom_call.1} parent=1 // pred_check_branch
      %29 = sbr.rel (0) target = $region9
    $region8: #{tpu_custom_call.1} parent=1 // pred_region
      %s31 = ssub.s32 128, 128
      %32 = vsyncadd [#allocation8], %s31
      %s34 = sshll.u32 [#allocation7], 4
      %s35 = int_to_ptr.vmem [resolvable:$true] %s34
      %37 = dma.hbm_to_vmem [thread:$0]  %s1, 128, %s35, [#allocation8]
    $region9: #{tpu_custom_call.1} parent=1 // pred_fallthru
      _
    // Predicated region
    $region10: #{tpu_custom_call.1} parent=1 // pred_check
      _
    $region11: #{tpu_custom_call.1} parent=1 // pred_check_branch
      %39 = sbr.rel (0) target = $region13
    $region12: #{tpu_custom_call.1} parent=1 // pred_region
      %s41 = ssub.s32 128, 128
      %42 = vsyncadd [#allocation8], %s41
      %s44 = sshll.u32 [#allocation9], 4
      %s45 = int_to_ptr.vmem [resolvable:$true] %s44
      %47 = dma.hbm_to_vmem [thread:$0]  %s2, 128, %s45, [#allocation8]
    $region13: #{tpu_custom_call.1} parent=1 // pred_fallthru
      _
    // Predicated region
    $region14: #{tpu_custom_call.1} parent=1 // pred_check
      _
    $region15: #{tpu_custom_call.1} parent=1 // pred_check_branch
      %49 = sbr.rel (0) target = $region17
    $region16: #{tpu_custom_call.1} parent=1 // pred_region
      %s51 = ssub.s32 384, 384
      %52 = vsyncadd [#allocation11], %s51
      %s54 = sshll.u32 [#allocation10], 4
      %s55 = int_to_ptr.vmem [resolvable:$true] %s54
      %57 = dma.hbm_to_vmem [thread:$0]  %s3, 384, %s55, [#allocation11]
    $region17: #{tpu_custom_call.1} parent=1 // pred_fallthru
      _
    // Predicated region
    $region18: #{tpu_custom_call.1} parent=1 // pred_check
      _
    $region19: #{tpu_custom_call.1} parent=1 // pred_check_branch
      %59 = sbr.rel (0) target = $region21
    $region20: #{tpu_custom_call.1} parent=1 // pred_region
      _
    $region21: #{tpu_custom_call.1} parent=1 // pred_fallthru
      _
    // Predicated region
    $region22: #{tpu_custom_call.1} parent=1 // pred_check
      _
    $region23: #{tpu_custom_call.1} parent=1 // pred_check_branch
      %61 = sbr.rel (0) target = $region25
    $region24: #{tpu_custom_call.1} parent=1 // pred_region
      %s63 = ssub.s32 16, 16
      %64 = vsyncadd [#allocation6], %s63
      %s66 = sshll.u32 %s5, 4
      %s67 = int_to_ptr.vmem [resolvable:$true] %s66
      %69 = dma.vmem_to_smem %s67, 16, [#allocation12], [#allocation6]
    $region25: #{tpu_custom_call.1} parent=1 // pred_fallthru
      _
    // Predicated region
    $region26: #{tpu_custom_call.1} parent=1 // pred_check
      _
    $region27: #{tpu_custom_call.1} parent=1 // pred_check_branch
      %71 = sbr.rel (0) target = $region29
    $region28: #{tpu_custom_call.1} parent=1 // pred_region
      %72 = dma.done [#allocation4], 128
    $region29: #{tpu_custom_call.1} parent=1 // pred_fallthru
      _
    // Predicated region
    $region30: #{tpu_custom_call.1} parent=1 // pred_check
      _
    $region31: #{tpu_custom_call.1} parent=1 // pred_check_branch
      %74 = sbr.rel (0) target = $region33
    $region32: #{tpu_custom_call.1} parent=1 // pred_region
      %75 = dma.done [#allocation8], 128
    $region33: #{tpu_custom_call.1} parent=1 // pred_fallthru
      _
    // Predicated region
    $region34: #{tpu_custom_call.1} parent=1 // pred_check
      _
    $region35: #{tpu_custom_call.1} parent=1 // pred_check_branch
      %77 = sbr.rel (0) target = $region37
    $region36: #{tpu_custom_call.1} parent=1 // pred_region
      %78 = dma.done [#allocation8], 128
    $region37: #{tpu_custom_call.1} parent=1 // pred_fallthru
      _
    // Predicated region
    $region38: #{tpu_custom_call.1} parent=1 // pred_check
      _
    $region39: #{tpu_custom_call.1} parent=1 // pred_check_branch
      %80 = sbr.rel (0) target = $region41
    $region40: #{tpu_custom_call.1} parent=1 // pred_region
      %81 = dma.done [#allocation11], 384
    $region41: #{tpu_custom_call.1} parent=1 // pred_fallthru
      _
    // Predicated region
    $region42: #{tpu_custom_call.1} parent=1 // pred_check
      _
    $region43: #{tpu_custom_call.1} parent=1 // pred_check_branch
      %83 = sbr.rel (0) target = $region45
    $region44: #{tpu_custom_call.1} parent=1 // pred_region
      %84 = dma.done [#allocation6], 16
    $region45: #{tpu_custom_call.1} parent=1 // pred_fallthru
      _
    %85 = sfence
    %v86 = vld [vmem:[#allocation3] sm:$0xff]
    %v87 = vld [vmem:[#allocation7] sm:$0xff]
    %vm88 = vcmask 64512
    %v90 = vsel %vm88, %v87, 0
    %92 = vmatprep.subr.mxu0 0.0
    %93 = vmatpush1.msra.mxu0 %v86
    %94 = vmatprep.subr.mxu0 0.0
    %95 = vmatpush1.msra.mxu0 0.0
    %96 = vmatprep.subr.mxu0 0.0
    %97 = vmatpush1.msra.mxu0 0.0
    %98 = vmatprep.subr.mxu0 0.0
    %99 = vmatpush1.msra.mxu0 0.0
    %100 = vmatprep.subr.mxu0 0.0
    %101 = vmatpush1.msra.mxu0 0.0
    %102 = vmatprep.subr.mxu0 0.0
    %103 = vmatpush1.msra.mxu0 0.0
    %104 = vmatprep.subr.mxu0 0.0
    %105 = vmatpush1.msra.mxu0 0.0
    %106 = vmatprep.subr.mxu0 0.0
    %107 = vmatpush1.msra.mxu0 0.0
    %108 = vmatprep.subr.mxu0 0.0
    %109 = vmatpush1.msra.mxu0 0.0
    %110 = vmatprep.subr.mxu0 0.0
    %111 = vmatpush1.msra.mxu0 0.0
    %112 = vmatprep.subr.mxu0 0.0
    %113 = vmatpush1.msra.mxu0 0.0
    %114 = vmatprep.subr.mxu0 0.0
    %115 = vmatpush1.msra.mxu0 0.0
    %116 = vmatprep.subr.mxu0 0.0
    %117 = vmatpush1.msra.mxu0 0.0
    %118 = vmatprep.subr.mxu0 0.0
    %119 = vmatpush1.msra.mxu0 0.0
    %120 = vmatprep.subr.mxu0 0.0
    %121 = vmatpush1.msra.mxu0 0.0
    %122 = vmatprep.subr.mxu0 0.0
    %123 = vmatpush1.msra.mxu0 0.0
    %124 = vmatprep.subr.mxu0 0.0
    %125 = vmatpush1.msra.mxu0 0.0
    %126 = vmatprep.subr.mxu0 0.0
    %127 = vmatpush1.msra.mxu0 0.0
    %128 = vmatprep.subr.mxu0 0.0
    %129 = vmatpush1.msra.mxu0 0.0
    %130 = vmatprep.subr.mxu0 0.0
    %131 = vmatpush1.msra.mxu0 0.0
    %132 = vmatprep.subr.mxu0 0.0
    %133 = vmatpush1.msra.mxu0 0.0
    %134 = vmatprep.subr.mxu0 0.0
    %135 = vmatpush1.msra.mxu0 0.0
    %136 = vmatprep.subr.mxu0 0.0
    %137 = vmatpush1.msra.mxu0 0.0
    %138 = vmatprep.subr.mxu0 0.0
    %139 = vmatpush1.msra.mxu0 0.0
    %140 = vmatprep.subr.mxu0 0.0
    %141 = vmatpush1.msra.mxu0 0.0
    %142 = vmatprep.subr.mxu0 0.0
    %143 = vmatpush1.msra.mxu0 0.0
    %144 = vmatprep.subr.mxu0 0.0
    %145 = vmatpush1.msra.mxu0 0.0
    %146 = vmatprep.subr.mxu0 0.0
    %147 = vmatpush1.msra.mxu0 0.0
    %148 = vmatprep.subr.mxu0 0.0
    %149 = vmatpush1.msra.mxu0 0.0
    %150 = vmatprep.subr.mxu0 0.0
    %151 = vmatpush1.msra.mxu0 0.0
    %152 = vmatprep.subr.mxu0 0.0
    %153 = vmatpush1.msra.mxu0 0.0
    %154 = vmatprep.subr.mxu0 0.0
    %155 = vmatpush1.msra.mxu0 0.0
    %156 = vmatprep.mubr.f32.mxu0 0.0
    %157 = vmatmul.mubr.f32.gmra.mrb[0].mxu0 %v90
    %v158 = vpop.f32.mrb[0].mxu0
    %v159 = vadd.f32 0.0, %v158
    %v160 = vpop.f32.mrb[0].mxu0
    %161 = vdwg.mxu0
    %v162 = vld [vmem:[#allocation9] sm:$0xff]
    %v164 = vsel %vm88, %v162, 0
    %166 = vmatprep.subr.mxu0 0.0
    %167 = vmatpush1.msra.mxu0 %v86
    %168 = vmatprep.subr.mxu0 0.0
    %169 = vmatpush1.msra.mxu0 0.0
    %170 = vmatprep.subr.mxu0 0.0
    %171 = vmatpush1.msra.mxu0 0.0
    %172 = vmatprep.subr.mxu0 0.0
    %173 = vmatpush1.msra.mxu0 0.0
    %174 = vmatprep.subr.mxu0 0.0
    %175 = vmatpush1.msra.mxu0 0.0
    %176 = vmatprep.subr.mxu0 0.0
    %177 = vmatpush1.msra.mxu0 0.0
    %178 = vmatprep.subr.mxu0 0.0
    %179 = vmatpush1.msra.mxu0 0.0
    %180 = vmatprep.subr.mxu0 0.0
    %181 = vmatpush1.msra.mxu0 0.0
    %182 = vmatprep.subr.mxu0 0.0
    %183 = vmatpush1.msra.mxu0 0.0
    %184 = vmatprep.subr.mxu0 0.0
    %185 = vmatpush1.msra.mxu0 0.0
    %186 = vmatprep.subr.mxu0 0.0
    %187 = vmatpush1.msra.mxu0 0.0
    %188 = vmatprep.subr.mxu0 0.0
    %189 = vmatpush1.msra.mxu0 0.0
    %190 = vmatprep.subr.mxu0 0.0
    %191 = vmatpush1.msra.mxu0 0.0
    %192 = vmatprep.subr.mxu0 0.0
    %193 = vmatpush1.msra.mxu0 0.0
    %194 = vmatprep.subr.mxu0 0.0
    %195 = vmatpush1.msra.mxu0 0.0
    %196 = vmatprep.subr.mxu0 0.0
    %197 = vmatpush1.msra.mxu0 0.0
    %198 = vmatprep.subr.mxu0 0.0
    %199 = vmatpush1.msra.mxu0 0.0
    %200 = vmatprep.subr.mxu0 0.0
    %201 = vmatpush1.msra.mxu0 0.0
    %202 = vmatprep.subr.mxu0 0.0
    %203 = vmatpush1.msra.mxu0 0.0
    %204 = vmatprep.subr.mxu0 0.0
    %205 = vmatpush1.msra.mxu0 0.0
    %206 = vmatprep.subr.mxu0 0.0
    %207 = vmatpush1.msra.mxu0 0.0
    %208 = vmatprep.subr.mxu0 0.0
    %209 = vmatpush1.msra.mxu0 0.0
    %210 = vmatprep.subr.mxu0 0.0
    %211 = vmatpush1.msra.mxu0 0.0
    %212 = vmatprep.subr.mxu0 0.0
    %213 = vmatpush1.msra.mxu0 0.0
    %214 = vmatprep.subr.mxu0 0.0
    %215 = vmatpush1.msra.mxu0 0.0
    %216 = vmatprep.subr.mxu0 0.0
    %217 = vmatpush1.msra.mxu0 0.0
    %218 = vmatprep.subr.mxu0 0.0
    %219 = vmatpush1.msra.mxu0 0.0
    %220 = vmatprep.subr.mxu0 0.0
    %221 = vmatpush1.msra.mxu0 0.0
    %222 = vmatprep.subr.mxu0 0.0
    %223 = vmatpush1.msra.mxu0 0.0
    %224 = vmatprep.subr.mxu0 0.0
    %225 = vmatpush1.msra.mxu0 0.0
    %226 = vmatprep.subr.mxu0 0.0
    %227 = vmatpush1.msra.mxu0 0.0
    %228 = vmatprep.subr.mxu0 0.0
    %229 = vmatpush1.msra.mxu0 0.0
    %230 = vmatprep.mubr.f32.mxu0 0.0
    %231 = vmatmul.mubr.f32.gmra.mrb[0].mxu0 %v164
    %v232 = vpop.f32.mrb[0].mxu0
    %v233 = vadd.f32 0.0, %v232
    %v234 = vpop.f32.mrb[0].mxu0
    %235 = vdwg.mxu0
    %v236 = vmul.f32 %v86, %v86
    %vm237 = vcmask 261120
    %v238 = vsel %vm237, %v236, 0.0
    %239 = vadd.xlane.f32.xlu0 %v238
    %v240 = vpop.xlane.xlu0 %239
    %v241 = vmul.f32 %v159, %v159
    %v242 = vsel %vm237, %v241, 0.0
    %243 = vadd.xlane.f32.xlu0 %v242
    %v244 = vpop.xlane.xlu0 %243
    %v245 = vmul.f32 %v233, %v233
    %v246 = vsel %vm237, %v245, 0.0
    %247 = vadd.xlane.f32.xlu0 %v246
    %v248 = vpop.xlane.xlu0 %247
    %v249 = vmul.f32 %v86, %v159
    %v250 = vsel %vm237, %v249, 0.0
    %251 = vadd.xlane.f32.xlu0 %v250
    %v252 = vpop.xlane.xlu0 %251
    %v253 = vmul.f32 %v240, %v244
    %v254 = vmax.f32 %v253, 1e-16
    %v255 = vrsqrt.pop %v254
    %v256 = vmul.f32 %v252, %v255
    %v257 = vmul.f32 %v86, %v233
    %v258 = vsel %vm237, %v257, 0.0
    %259 = vadd.xlane.f32.xlu0 %v258
    %v260 = vpop.xlane.xlu0 %259
    %v261 = vmul.f32 %v240, %v248
    %v262 = vmax.f32 %v261, 1e-16
    %v263 = vrsqrt.pop %v262
    %v264 = vmul.f32 %v260, %v263
    %vm265 = vcmask 1047824
    %266 = vst.msk [vmem:[#allocation2 + $0x10] sm:$0xff] %vm265, 0.0
    %267 = vst.msk [vmem:[#allocation2] sm:$0xff] %vm237, %v86
    %269 = vrot.lane.b32.xlu0 %v86, 32
    %v270 = vpop.permute.xlu0 %269
    %vm272 = vcmask 523520
    %273 = vst.msk [vmem:[#allocation2] sm:$0xff] %vm272, %v270
    %275 = vrot.lane.b32.xlu0 %v159, 64
    %v276 = vpop.permute.xlu0 %275
    %vm278 = vcmask 785920
    %279 = vst.msk [vmem:[#allocation2] sm:$0xff] %vm278, %v276
    %281 = vrot.lane.b32.xlu0 %v249, 96
    %v282 = vpop.permute.xlu0 %281
    %vm284 = vcmask 1048320
    %285 = vst.msk [vmem:[#allocation2] sm:$0xff] %vm284, %v282
    %v286 = vsub.f32 %v159, %v86
    %287 = vst.msk [vmem:[#allocation2 + $0x8] sm:$0xff] %vm237, %v286
    %288 = vst.msk [vmem:[#allocation2 + $0x8] sm:$0xff] %vm272, %v270
    %290 = vrot.lane.b32.xlu0 %v233, 64
    %v291 = vpop.permute.xlu0 %290
    %293 = vst.msk [vmem:[#allocation2 + $0x8] sm:$0xff] %vm278, %v291
    %295 = vrot.lane.b32.xlu0 %v257, 96
    %v296 = vpop.permute.xlu0 %295
    %298 = vst.msk [vmem:[#allocation2 + $0x8] sm:$0xff] %vm284, %v296
    %v299 = vsub.f32 %v233, %v86
    %300 = vst.msk [vmem:[#allocation2 + $0x10] sm:$0xff] %vm237, %v299
    %vm301 = vcmask 269568
    %302 = vst.msk [vmem:[#allocation2 + $0x10] sm:$0xff] %vm301, %v256
    %vm303 = vcmask 277768
    %304 = vst.msk [vmem:[#allocation2 + $0x10] sm:$0xff] %vm303, %v264
    %v305 = vld [vmem:[#allocation2] sm:$0xff]
    %v306 = vld [vmem:[#allocation2 + $0x8] sm:$0xff]
    %v307 = vld [vmem:[#allocation2 + $0x10] sm:$0xff]
    %v308 = vld [vmem:[#allocation10] sm:$0x1f]
    %v309 = vld [vmem:[#allocation10 + $0x8] sm:$0x1f]
    %v310 = vld [vmem:[#allocation10 + $0x10] sm:$0x1f]
    %311 = vmatprep.subr.mxu0 %v306
    %312 = vmatpush1.xpose.msra.mxu0 %v305
    %313 = vmatprep.subr.mxu0 0.0
    %314 = vmatpush1.xpose.msra.mxu0 0.0
    %315 = vmatprep.subr.mxu0 0.0
    %316 = vmatpush1.xpose.msra.mxu0 0.0
    %317 = vmatprep.subr.mxu0 0.0
    %318 = vmatpush1.xpose.msra.mxu0 0.0
    %319 = vmatprep.subr.mxu0 0.0
    %320 = vmatpush1.xpose.msra.mxu0 0.0
    %321 = vmatprep.subr.mxu0 0.0
    %322 = vmatpush1.xpose.msra.mxu0 0.0
    %323 = vmatprep.subr.mxu0 0.0
    %324 = vmatpush1.xpose.msra.mxu0 0.0
    %325 = vmatprep.subr.mxu0 0.0
    %326 = vmatpush1.xpose.msra.mxu0 0.0
    %327 = vmatprep.subr.mxu0 0.0
    %328 = vmatpush1.xpose.msra.mxu0 0.0
    %329 = vmatprep.subr.mxu0 0.0
    %330 = vmatpush1.xpose.msra.mxu0 0.0
    %331 = vmatprep.subr.mxu0 0.0
    %332 = vmatpush1.xpose.msra.mxu0 0.0
    %333 = vmatprep.subr.mxu0 0.0
    %334 = vmatpush1.xpose.msra.mxu0 0.0
    %335 = vmatprep.subr.mxu0 0.0
    %336 = vmatpush1.xpose.msra.mxu0 0.0
    %337 = vmatprep.subr.mxu0 0.0
    %338 = vmatpush1.xpose.msra.mxu0 0.0
    %339 = vmatprep.subr.mxu0 0.0
    %340 = vmatpush1.xpose.msra.mxu0 0.0
    %341 = vmatprep.subr.mxu0 0.0
    %342 = vmatpush1.xpose.msra.mxu0 0.0
    %343 = vmatprep.subr.mxu0 0.0
    %344 = vmatpush1.xpose.msra.mxu0 0.0
    %345 = vmatprep.subr.mxu0 0.0
    %346 = vmatpush1.xpose.msra.mxu0 0.0
    %347 = vmatprep.subr.mxu0 0.0
    %348 = vmatpush1.xpose.msra.mxu0 0.0
    %349 = vmatprep.subr.mxu0 0.0
    %350 = vmatpush1.xpose.msra.mxu0 0.0
    %351 = vmatprep.subr.mxu0 0.0
    %352 = vmatpush1.xpose.msra.mxu0 0.0
    %353 = vmatprep.subr.mxu0 0.0
    %354 = vmatpush1.xpose.msra.mxu0 0.0
    %355 = vmatprep.subr.mxu0 0.0
    %356 = vmatpush1.xpose.msra.mxu0 0.0
    %357 = vmatprep.subr.mxu0 0.0
    %358 = vmatpush1.xpose.msra.mxu0 0.0
    %359 = vmatprep.subr.mxu0 0.0
    %360 = vmatpush1.xpose.msra.mxu0 0.0
    %361 = vmatprep.subr.mxu0 0.0
    %362 = vmatpush1.xpose.msra.mxu0 0.0
    %363 = vmatprep.subr.mxu0 0.0
    %364 = vmatpush1.xpose.msra.mxu0 0.0
    %365 = vmatprep.subr.mxu0 0.0
    %366 = vmatpush1.xpose.msra.mxu0 0.0
    %367 = vmatprep.subr.mxu0 0.0
    %368 = vmatpush1.xpose.msra.mxu0 0.0
    %369 = vmatprep.subr.mxu0 0.0
    %370 = vmatpush1.xpose.msra.mxu0 0.0
    %371 = vmatprep.subr.mxu0 0.0
    %372 = vmatpush1.xpose.msra.mxu0 0.0
    %373 = vmatprep.subr.mxu0 0.0
    %374 = vmatpush1.xpose.msra.mxu0 0.0
    %375 = vmatprep.mubr.f32.mxu0 %v309
    %376 = vmatmul.mubr.f32.gmra.mrb[0].mxu0 %v308
    %v377 = vpop.f32.mrb[0].mxu0
    %v378 = vadd.f32 0.0, %v377
    %v379 = vpop.f32.mrb[0].mxu0
    %380 = vdwg.mxu0
    %381 = vmatprep.subr.mxu0 0.0
    %382 = vmatpush1.xpose.msra.mxu0 %v307
    %383 = vmatprep.subr.mxu0 0.0
    %384 = vmatpush1.xpose.msra.mxu0 0.0
    %385 = vmatprep.subr.mxu0 0.0
    %386 = vmatpush1.xpose.msra.mxu0 0.0
    %387 = vmatprep.subr.mxu0 0.0
    %388 = vmatpush1.xpose.msra.mxu0 0.0
    %389 = vmatprep.subr.mxu0 0.0
    %390 = vmatpush1.xpose.msra.mxu0 0.0
    %391 = vmatprep.subr.mxu0 0.0
    %392 = vmatpush1.xpose.msra.mxu0 0.0
    %393 = vmatprep.subr.mxu0 0.0
    %394 = vmatpush1.xpose.msra.mxu0 0.0
    %395 = vmatprep.subr.mxu0 0.0
    %396 = vmatpush1.xpose.msra.mxu0 0.0
    %397 = vmatprep.subr.mxu0 0.0
    %398 = vmatpush1.xpose.msra.mxu0 0.0
    %399 = vmatprep.subr.mxu0 0.0
    %400 = vmatpush1.xpose.msra.mxu0 0.0
    %401 = vmatprep.subr.mxu0 0.0
    %402 = vmatpush1.xpose.msra.mxu0 0.0
    %403 = vmatprep.subr.mxu0 0.0
    %404 = vmatpush1.xpose.msra.mxu0 0.0
    %405 = vmatprep.subr.mxu0 0.0
    %406 = vmatpush1.xpose.msra.mxu0 0.0
    %407 = vmatprep.subr.mxu0 0.0
    %408 = vmatpush1.xpose.msra.mxu0 0.0
    %409 = vmatprep.subr.mxu0 0.0
    %410 = vmatpush1.xpose.msra.mxu0 0.0
    %411 = vmatprep.subr.mxu0 0.0
    %412 = vmatpush1.xpose.msra.mxu0 0.0
    %413 = vmatprep.subr.mxu0 0.0
    %414 = vmatpush1.xpose.msra.mxu0 0.0
    %415 = vmatprep.subr.mxu0 0.0
    %416 = vmatpush1.xpose.msra.mxu0 0.0
    %417 = vmatprep.subr.mxu0 0.0
    %418 = vmatpush1.xpose.msra.mxu0 0.0
    %419 = vmatprep.subr.mxu0 0.0
    %420 = vmatpush1.xpose.msra.mxu0 0.0
    %421 = vmatprep.subr.mxu0 0.0
    %422 = vmatpush1.xpose.msra.mxu0 0.0
    %423 = vmatprep.subr.mxu0 0.0
    %424 = vmatpush1.xpose.msra.mxu0 0.0
    %425 = vmatprep.subr.mxu0 0.0
    %426 = vmatpush1.xpose.msra.mxu0 0.0
    %427 = vmatprep.subr.mxu0 0.0
    %428 = vmatpush1.xpose.msra.mxu0 0.0
    %429 = vmatprep.subr.mxu0 0.0
    %430 = vmatpush1.xpose.msra.mxu0 0.0
    %431 = vmatprep.subr.mxu0 0.0
    %432 = vmatpush1.xpose.msra.mxu0 0.0
    %433 = vmatprep.subr.mxu0 0.0
    %434 = vmatpush1.xpose.msra.mxu0 0.0
    %435 = vmatprep.subr.mxu0 0.0
    %436 = vmatpush1.xpose.msra.mxu0 0.0
    %437 = vmatprep.subr.mxu0 0.0
    %438 = vmatpush1.xpose.msra.mxu0 0.0
    %439 = vmatprep.subr.mxu0 0.0
    %440 = vmatpush1.xpose.msra.mxu0 0.0
    %441 = vmatprep.subr.mxu0 0.0
    %442 = vmatpush1.xpose.msra.mxu0 0.0
    %443 = vmatprep.subr.mxu0 0.0
    %444 = vmatpush1.xpose.msra.mxu0 0.0
    %445 = vmatprep.mubr.f32.mxu0 0.0
    %446 = vmatmul.mubr.f32.gmra.mrb[0].mxu0 %v310
    %v447 = vpop.f32.mrb[0].mxu0
    %v448 = vadd.f32 %v378, %v447
    %v449 = vpop.f32.mrb[0].mxu0
    %450 = vdwg.mxu0
    %vm451 = vcmask 61440
    %v452 = vsel %vm451, %v448, -inf
    %453 = vmax.xlane.f32.xlu0 %v452
    %v454 = vpop.xlane.xlu0 %453
    %v455 = vsub.f32 %v448, %v454
    %v456 = vmul.f32 %v455, 1.442695
    %v457 = vpow.pop %v456
    %v458 = vsel %vm451, %v457, 0.0
    %459 = vadd.xlane.f32.xlu0 %v458
    %v460 = vpop.xlane.xlu0 %459
    %v461 = vrcp.pop %v460
    %v462 = vmul.f32 %v457, %v461
    %v463 = vadd.f32 %v462, 1e-11
    %464 = vst.msk [vmem:[#allocation13] sm:$0x1f] %vm451, %v463
    %v466 = vsel %vm88, %v462, 0
    %468 = vmatprep.subr.mxu0 %v306
    %469 = vmatpush1.msra.mxu0 %v305
    %470 = vmatprep.subr.mxu0 0.0
    %471 = vmatpush1.msra.mxu0 0.0
    %472 = vmatprep.subr.mxu0 0.0
    %473 = vmatpush1.msra.mxu0 0.0
    %474 = vmatprep.subr.mxu0 0.0
    %475 = vmatpush1.msra.mxu0 0.0
    %476 = vmatprep.subr.mxu0 0.0
    %477 = vmatpush1.msra.mxu0 0.0
    %478 = vmatprep.subr.mxu0 0.0
    %479 = vmatpush1.msra.mxu0 0.0
    %480 = vmatprep.subr.mxu0 0.0
    %481 = vmatpush1.msra.mxu0 0.0
    %482 = vmatprep.subr.mxu0 0.0
    %483 = vmatpush1.msra.mxu0 0.0
    %484 = vmatprep.subr.mxu0 0.0
    %485 = vmatpush1.msra.mxu0 0.0
    %486 = vmatprep.subr.mxu0 0.0
    %487 = vmatpush1.msra.mxu0 0.0
    %488 = vmatprep.subr.mxu0 0.0
    %489 = vmatpush1.msra.mxu0 0.0
    %490 = vmatprep.subr.mxu0 0.0
    %491 = vmatpush1.msra.mxu0 0.0
    %492 = vmatprep.subr.mxu0 0.0
    %493 = vmatpush1.msra.mxu0 0.0
    %494 = vmatprep.subr.mxu0 0.0
    %495 = vmatpush1.msra.mxu0 0.0
    %496 = vmatprep.subr.mxu0 0.0
    %497 = vmatpush1.msra.mxu0 0.0
    %498 = vmatprep.subr.mxu0 0.0
    %499 = vmatpush1.msra.mxu0 0.0
    %500 = vmatprep.subr.mxu0 0.0
    %501 = vmatpush1.msra.mxu0 0.0
    %502 = vmatprep.subr.mxu0 0.0
    %503 = vmatpush1.msra.mxu0 0.0
    %504 = vmatprep.subr.mxu0 0.0
    %505 = vmatpush1.msra.mxu0 0.0
    %506 = vmatprep.subr.mxu0 0.0
    %507 = vmatpush1.msra.mxu0 0.0
    %508 = vmatprep.subr.mxu0 0.0
    %509 = vmatpush1.msra.mxu0 0.0
    %510 = vmatprep.subr.mxu0 0.0
    %511 = vmatpush1.msra.mxu0 0.0
    %512 = vmatprep.subr.mxu0 0.0
    %513 = vmatpush1.msra.mxu0 0.0
    %514 = vmatprep.subr.mxu0 0.0
    %515 = vmatpush1.msra.mxu0 0.0
    %516 = vmatprep.subr.mxu0 0.0
    %517 = vmatpush1.msra.mxu0 0.0
    %518 = vmatprep.subr.mxu0 0.0
    %519 = vmatpush1.msra.mxu0 0.0
    %520 = vmatprep.subr.mxu0 0.0
    %521 = vmatpush1.msra.mxu0 0.0
    %522 = vmatprep.subr.mxu0 0.0
    %523 = vmatpush1.msra.mxu0 0.0
    %524 = vmatprep.subr.mxu0 0.0
    %525 = vmatpush1.msra.mxu0 0.0
    %526 = vmatprep.subr.mxu0 0.0
    %527 = vmatpush1.msra.mxu0 0.0
    %528 = vmatprep.subr.mxu0 0.0
    %529 = vmatpush1.msra.mxu0 0.0
    %530 = vmatprep.subr.mxu0 0.0
    %531 = vmatpush1.msra.mxu0 0.0
    %532 = vmatprep.mubr.f32.mxu0 0.0
    %533 = vmatmul.mubr.f32.gmra.mrb[0].mxu0 %v466
    %v534 = vpop.f32.mrb[0].mxu0
    %v535 = vadd.f32 0.0, %v534
    %v536 = vpop.f32.mrb[0].mxu0
    %v537 = vadd.f32 0.0, %v536
    %538 = vdwg.mxu0
    %539 = vmatprep.subr.mxu0 0.0
    %540 = vmatpush1.msra.mxu0 %v307
    %541 = vmatprep.subr.mxu0 0.0
    %542 = vmatpush1.msra.mxu0 0.0
    %543 = vmatprep.subr.mxu0 0.0
    %544 = vmatpush1.msra.mxu0 0.0
    %545 = vmatprep.subr.mxu0 0.0
    %546 = vmatpush1.msra.mxu0 0.0
    %547 = vmatprep.subr.mxu0 0.0
    %548 = vmatpush1.msra.mxu0 0.0
    %549 = vmatprep.subr.mxu0 0.0
    %550 = vmatpush1.msra.mxu0 0.0
    %551 = vmatprep.subr.mxu0 0.0
    %552 = vmatpush1.msra.mxu0 0.0
    %553 = vmatprep.subr.mxu0 0.0
    %554 = vmatpush1.msra.mxu0 0.0
    %555 = vmatprep.subr.mxu0 0.0
    %556 = vmatpush1.msra.mxu0 0.0
    %557 = vmatprep.subr.mxu0 0.0
    %558 = vmatpush1.msra.mxu0 0.0
    %559 = vmatprep.subr.mxu0 0.0
    %560 = vmatpush1.msra.mxu0 0.0
    %561 = vmatprep.subr.mxu0 0.0
    %562 = vmatpush1.msra.mxu0 0.0
    %563 = vmatprep.subr.mxu0 0.0
    %564 = vmatpush1.msra.mxu0 0.0
    %565 = vmatprep.subr.mxu0 0.0
    %566 = vmatpush1.msra.mxu0 0.0
    %567 = vmatprep.subr.mxu0 0.0
    %568 = vmatpush1.msra.mxu0 0.0
    %569 = vmatprep.subr.mxu0 0.0
    %570 = vmatpush1.msra.mxu0 0.0
    %571 = vmatprep.subr.mxu0 0.0
    %572 = vmatpush1.msra.mxu0 0.0
    %573 = vmatprep.subr.mxu0 0.0
    %574 = vmatpush1.msra.mxu0 0.0
    %575 = vmatprep.subr.mxu0 0.0
    %576 = vmatpush1.msra.mxu0 0.0
    %577 = vmatprep.subr.mxu0 0.0
    %578 = vmatpush1.msra.mxu0 0.0
    %579 = vmatprep.subr.mxu0 0.0
    %580 = vmatpush1.msra.mxu0 0.0
    %581 = vmatprep.subr.mxu0 0.0
    %582 = vmatpush1.msra.mxu0 0.0
    %583 = vmatprep.subr.mxu0 0.0
    %584 = vmatpush1.msra.mxu0 0.0
    %585 = vmatprep.subr.mxu0 0.0
    %586 = vmatpush1.msra.mxu0 0.0
    %587 = vmatprep.subr.mxu0 0.0
    %588 = vmatpush1.msra.mxu0 0.0
    %589 = vmatprep.subr.mxu0 0.0
    %590 = vmatpush1.msra.mxu0 0.0
    %591 = vmatprep.subr.mxu0 0.0
    %592 = vmatpush1.msra.mxu0 0.0
    %593 = vmatprep.subr.mxu0 0.0
    %594 = vmatpush1.msra.mxu0 0.0
    %595 = vmatprep.subr.mxu0 0.0
    %596 = vmatpush1.msra.mxu0 0.0
    %597 = vmatprep.subr.mxu0 0.0
    %598 = vmatpush1.msra.mxu0 0.0
    %599 = vmatprep.subr.mxu0 0.0
    %600 = vmatpush1.msra.mxu0 0.0
    %601 = vmatprep.subr.mxu0 0.0
    %602 = vmatpush1.msra.mxu0 0.0
    %603 = vmatprep.mubr.f32.mxu0 0.0
    %604 = vmatmul.mubr.f32.gmra.mrb[0].mxu0 %v466
    %v605 = vpop.f32.mrb[0].mxu0
    %v606 = vadd.f32 0.0, %v605
    %v607 = vpop.f32.mrb[0].mxu0
    %608 = vdwg.mxu0
    %v609 = vmul.f32 %v535, 0.125
    %v610 = vmul.f32 %v537, 0.125
    %v611 = vmul.f32 %v606, 0.125
    %v612 = vmul.f32 %v305, %v305
    %v613 = vmul.f32 %v306, %v306
    %v614 = vmul.f32 %v307, %v307
    %v615 = vadd.f32 %v612, %v613
    %v616 = vadd.f32 %v615, %v614
    %617 = vadd.xlane.f32.xlu0 %v616
    %v618 = vpop.xlane.xlu0 %617
    %v619 = vmul.f32 %v609, %v609
    %v620 = vmul.f32 %v610, %v610
    %v621 = vmul.f32 %v611, %v611
    %vm622 = vcmask 1044480
    %v623 = vsel %vm622, %v619, 0.0
    %v624 = vsel %vm622, %v620, 0.0
    %v625 = vadd.f32 %v623, %v624
    %v626 = vsel %vm622, %v621, 0.0
    %v627 = vadd.f32 %v625, %v626
    %628 = vadd.xlane.f32.xlu0 %v627
    %v629 = vpop.xlane.xlu0 %628
    %630 = vmatprep.subr.mxu0 %v610
    %631 = vmatpush1.xpose.msra.mxu0 %v609
    %632 = vmatprep.subr.mxu0 0.0
    %633 = vmatpush1.xpose.msra.mxu0 0.0
    %634 = vmatprep.subr.mxu0 0.0
    %635 = vmatpush1.xpose.msra.mxu0 0.0
    %636 = vmatprep.subr.mxu0 0.0
    %637 = vmatpush1.xpose.msra.mxu0 0.0
    %638 = vmatprep.subr.mxu0 0.0
    %639 = vmatpush1.xpose.msra.mxu0 0.0
    %640 = vmatprep.subr.mxu0 0.0
    %641 = vmatpush1.xpose.msra.mxu0 0.0
    %642 = vmatprep.subr.mxu0 0.0
    %643 = vmatpush1.xpose.msra.mxu0 0.0
    %644 = vmatprep.subr.mxu0 0.0
    %645 = vmatpush1.xpose.msra.mxu0 0.0
    %646 = vmatprep.subr.mxu0 0.0
    %647 = vmatpush1.xpose.msra.mxu0 0.0
    %648 = vmatprep.subr.mxu0 0.0
    %649 = vmatpush1.xpose.msra.mxu0 0.0
    %650 = vmatprep.subr.mxu0 0.0
    %651 = vmatpush1.xpose.msra.mxu0 0.0
    %652 = vmatprep.subr.mxu0 0.0
    %653 = vmatpush1.xpose.msra.mxu0 0.0
    %654 = vmatprep.subr.mxu0 0.0
    %655 = vmatpush1.xpose.msra.mxu0 0.0
    %656 = vmatprep.subr.mxu0 0.0
    %657 = vmatpush1.xpose.msra.mxu0 0.0
    %658 = vmatprep.subr.mxu0 0.0
    %659 = vmatpush1.xpose.msra.mxu0 0.0
    %660 = vmatprep.subr.mxu0 0.0
    %661 = vmatpush1.xpose.msra.mxu0 0.0
    %662 = vmatprep.subr.mxu0 0.0
    %663 = vmatpush1.xpose.msra.mxu0 0.0
    %664 = vmatprep.subr.mxu0 0.0
    %665 = vmatpush1.xpose.msra.mxu0 0.0
    %666 = vmatprep.subr.mxu0 0.0
    %667 = vmatpush1.xpose.msra.mxu0 0.0
    %668 = vmatprep.subr.mxu0 0.0
    %669 = vmatpush1.xpose.msra.mxu0 0.0
    %670 = vmatprep.subr.mxu0 0.0
    %671 = vmatpush1.xpose.msra.mxu0 0.0
    %672 = vmatprep.subr.mxu0 0.0
    %673 = vmatpush1.xpose.msra.mxu0 0.0
    %674 = vmatprep.subr.mxu0 0.0
    %675 = vmatpush1.xpose.msra.mxu0 0.0
    %676 = vmatprep.subr.mxu0 0.0
    %677 = vmatpush1.xpose.msra.mxu0 0.0
    %678 = vmatprep.subr.mxu0 0.0
    %679 = vmatpush1.xpose.msra.mxu0 0.0
    %680 = vmatprep.subr.mxu0 0.0
    %681 = vmatpush1.xpose.msra.mxu0 0.0
    %682 = vmatprep.subr.mxu0 0.0
    %683 = vmatpush1.xpose.msra.mxu0 0.0
    %684 = vmatprep.subr.mxu0 0.0
    %685 = vmatpush1.xpose.msra.mxu0 0.0
    %686 = vmatprep.subr.mxu0 0.0
    %687 = vmatpush1.xpose.msra.mxu0 0.0
    %688 = vmatprep.subr.mxu0 0.0
    %689 = vmatpush1.xpose.msra.mxu0 0.0
    %690 = vmatprep.subr.mxu0 0.0
    %691 = vmatpush1.xpose.msra.mxu0 0.0
    %692 = vmatprep.subr.mxu0 0.0
    %693 = vmatpush1.xpose.msra.mxu0 0.0
    %694 = vmatprep.mubr.f32.mxu0 %v306
    %695 = vmatmul.mubr.f32.gmra.mrb[0].mxu0 %v305
    %v696 = vpop.f32.mrb[0].mxu0
    %v697 = vadd.f32 0.0, %v696
    %v698 = vpop.f32.mrb[0].mxu0
    %699 = vdwg.mxu0
    %700 = vmatprep.subr.mxu0 0.0
    %701 = vmatpush1.xpose.msra.mxu0 %v611
    %702 = vmatprep.subr.mxu0 0.0
    %703 = vmatpush1.xpose.msra.mxu0 0.0
    %704 = vmatprep.subr.mxu0 0.0
    %705 = vmatpush1.xpose.msra.mxu0 0.0
    %706 = vmatprep.subr.mxu0 0.0
    %707 = vmatpush1.xpose.msra.mxu0 0.0
    %708 = vmatprep.subr.mxu0 0.0
    %709 = vmatpush1.xpose.msra.mxu0 0.0
    %710 = vmatprep.subr.mxu0 0.0
    %711 = vmatpush1.xpose.msra.mxu0 0.0
    %712 = vmatprep.subr.mxu0 0.0
    %713 = vmatpush1.xpose.msra.mxu0 0.0
    %714 = vmatprep.subr.mxu0 0.0
    %715 = vmatpush1.xpose.msra.mxu0 0.0
    %716 = vmatprep.subr.mxu0 0.0
    %717 = vmatpush1.xpose.msra.mxu0 0.0
    %718 = vmatprep.subr.mxu0 0.0
    %719 = vmatpush1.xpose.msra.mxu0 0.0
    %720 = vmatprep.subr.mxu0 0.0
    %721 = vmatpush1.xpose.msra.mxu0 0.0
    %722 = vmatprep.subr.mxu0 0.0
    %723 = vmatpush1.xpose.msra.mxu0 0.0
    %724 = vmatprep.subr.mxu0 0.0
    %725 = vmatpush1.xpose.msra.mxu0 0.0
    %726 = vmatprep.subr.mxu0 0.0
    %727 = vmatpush1.xpose.msra.mxu0 0.0
    %728 = vmatprep.subr.mxu0 0.0
    %729 = vmatpush1.xpose.msra.mxu0 0.0
    %730 = vmatprep.subr.mxu0 0.0
    %731 = vmatpush1.xpose.msra.mxu0 0.0
    %732 = vmatprep.subr.mxu0 0.0
    %733 = vmatpush1.xpose.msra.mxu0 0.0
    %734 = vmatprep.subr.mxu0 0.0
    %735 = vmatpush1.xpose.msra.mxu0 0.0
    %736 = vmatprep.subr.mxu0 0.0
    %737 = vmatpush1.xpose.msra.mxu0 0.0
    %738 = vmatprep.subr.mxu0 0.0
    %739 = vmatpush1.xpose.msra.mxu0 0.0
    %740 = vmatprep.subr.mxu0 0.0
    %741 = vmatpush1.xpose.msra.mxu0 0.0
    %742 = vmatprep.subr.mxu0 0.0
    %743 = vmatpush1.xpose.msra.mxu0 0.0
    %744 = vmatprep.subr.mxu0 0.0
    %745 = vmatpush1.xpose.msra.mxu0 0.0
    %746 = vmatprep.subr.mxu0 0.0
    %747 = vmatpush1.xpose.msra.mxu0 0.0
    %748 = vmatprep.subr.mxu0 0.0
    %749 = vmatpush1.xpose.msra.mxu0 0.0
    %750 = vmatprep.subr.mxu0 0.0
    %751 = vmatpush1.xpose.msra.mxu0 0.0
    %752 = vmatprep.subr.mxu0 0.0
    %753 = vmatpush1.xpose.msra.mxu0 0.0
    %754 = vmatprep.subr.mxu0 0.0
    %755 = vmatpush1.xpose.msra.mxu0 0.0
    %756 = vmatprep.subr.mxu0 0.0
    %757 = vmatpush1.xpose.msra.mxu0 0.0
    %758 = vmatprep.subr.mxu0 0.0
    %759 = vmatpush1.xpose.msra.mxu0 0.0
    %760 = vmatprep.subr.mxu0 0.0
    %761 = vmatpush1.xpose.msra.mxu0 0.0
    %762 = vmatprep.subr.mxu0 0.0
    %763 = vmatpush1.xpose.msra.mxu0 0.0
    %764 = vmatprep.mubr.f32.mxu0 0.0
    %765 = vmatmul.mubr.f32.gmra.mrb[0].mxu0 %v307
    %v766 = vpop.f32.mrb[0].mxu0
    %v767 = vadd.f32 %v697, %v766
    %v768 = vpop.f32.mrb[0].mxu0
    %769 = vdwg.mxu0
    %v770 = vlaneseq
    %v771 = vshrl.u32 %v770, 7
    %v772 = vsub.s32 0, %v771
    %v773 = vrot.slane %v609, %v772
    %v774 = vlaneseq
    %v775 = vshrl.u32 %v774, 7
    %v776 = vsub.s32 0, %v775
    %v777 = vrot.slane %v610, %v776
    %v778 = vlaneseq
    %v779 = vshrl.u32 %v778, 7
    %v780 = vsub.s32 0, %v779
    %v781 = vrot.slane %v611, %v780
    %v782 = vmul.f32 %v773, %v305
    %v783 = vmul.f32 %v777, %v306
    %v784 = vmul.f32 %v781, %v307
    %v785 = vsub.f32 %v773, %v305
    %v786 = vsub.f32 %v777, %v306
    %v787 = vsub.f32 %v781, %v307
    %v788 = vlaneseq
    %v789 = vshrl.u32 %v788, 7
    %v790 = vsub.s32 0, %v789
    %v791 = vrot.slane %v629, %v790
    %v792 = vmul.f32 %v618, %v791
    %v793 = vmax.f32 %v792, 1e-16
    %v794 = vrsqrt.pop %v793
    %v795 = vmul.f32 %v767, %v794
    %v796 = vlaneseq
    %v797 = vshrl.u32 %v796, 7
    %v798 = vsub.s32 1, %v797
    %v799 = vrot.slane %v609, %v798
    %v800 = vlaneseq
    %v801 = vshrl.u32 %v800, 7
    %v802 = vsub.s32 1, %v801
    %v803 = vrot.slane %v610, %v802
    %v804 = vlaneseq
    %v805 = vshrl.u32 %v804, 7
    %v806 = vsub.s32 1, %v805
    %v807 = vrot.slane %v611, %v806
    %v808 = vmul.f32 %v799, %v305
    %v809 = vmul.f32 %v803, %v306
    %v810 = vmul.f32 %v807, %v307
    %v811 = vsub.f32 %v799, %v305
    %v812 = vsub.f32 %v803, %v306
    %v813 = vsub.f32 %v807, %v307
    %v814 = vlaneseq
    %v815 = vshrl.u32 %v814, 7
    %v816 = vsub.s32 1, %v815
    %v817 = vrot.slane %v629, %v816
    %v818 = vmul.f32 %v618, %v817
    %v819 = vmax.f32 %v818, 1e-16
    %v820 = vrsqrt.pop %v819
    %v821 = vmul.f32 %v767, %v820
    %v822 = vmax.f32 %v782, %v808
    %v823 = vmax.f32 %v783, %v809
    %v824 = vmax.f32 %v784, %v810
    %v825 = vmax.f32 %v785, %v811
    %v826 = vmax.f32 %v786, %v812
    %v827 = vmax.f32 %v787, %v813
    %829 = vrot.lane.b32.xlu0 %v821, 127
    %v830 = vpop.permute.xlu0 %829
    %v832 = vmax.f32 %v795, %v830
    %v833 = vlaneseq
    %v834 = vshrl.u32 %v833, 7
    %v835 = vsub.s32 2, %v834
    %v836 = vrot.slane %v609, %v835
    %v837 = vlaneseq
    %v838 = vshrl.u32 %v837, 7
    %v839 = vsub.s32 2, %v838
    %v840 = vrot.slane %v610, %v839
    %v841 = vlaneseq
    %v842 = vshrl.u32 %v841, 7
    %v843 = vsub.s32 2, %v842
    %v844 = vrot.slane %v611, %v843
    %v845 = vmul.f32 %v836, %v305
    %v846 = vmul.f32 %v840, %v306
    %v847 = vmul.f32 %v844, %v307
    %v848 = vsub.f32 %v836, %v305
    %v849 = vsub.f32 %v840, %v306
    %v850 = vsub.f32 %v844, %v307
    %v851 = vlaneseq
    %v852 = vshrl.u32 %v851, 7
    %v853 = vsub.s32 2, %v852
    %v854 = vrot.slane %v629, %v853
    %v855 = vmul.f32 %v618, %v854
    %v856 = vmax.f32 %v855, 1e-16
    %v857 = vrsqrt.pop %v856
    %v858 = vmul.f32 %v767, %v857
    %v859 = vmax.f32 %v822, %v845
    %v860 = vmax.f32 %v823, %v846
    %v861 = vmax.f32 %v824, %v847
    %v862 = vmax.f32 %v825, %v848
    %v863 = vmax.f32 %v826, %v849
    %v864 = vmax.f32 %v827, %v850
    %866 = vrot.lane.b32.xlu0 %v858, 126
    %v867 = vpop.permute.xlu0 %866
    %v869 = vmax.f32 %v832, %v867
    %v870 = vlaneseq
    %v871 = vshrl.u32 %v870, 7
    %v872 = vsub.s32 3, %v871
    %v873 = vrot.slane %v609, %v872
    %v874 = vlaneseq
    %v875 = vshrl.u32 %v874, 7
    %v876 = vsub.s32 3, %v875
    %v877 = vrot.slane %v610, %v876
    %v878 = vlaneseq
    %v879 = vshrl.u32 %v878, 7
    %v880 = vsub.s32 3, %v879
    %v881 = vrot.slane %v611, %v880
    %v882 = vmul.f32 %v873, %v305
    %v883 = vmul.f32 %v877, %v306
    %v884 = vmul.f32 %v881, %v307
    %v885 = vsub.f32 %v873, %v305
    %v886 = vsub.f32 %v877, %v306
    %v887 = vsub.f32 %v881, %v307
    %v888 = vlaneseq
    %v889 = vshrl.u32 %v888, 7
    %v890 = vsub.s32 3, %v889
    %v891 = vrot.slane %v629, %v890
    %v892 = vmul.f32 %v618, %v891
    %v893 = vmax.f32 %v892, 1e-16
    %v894 = vrsqrt.pop %v893
    %v895 = vmul.f32 %v767, %v894
    %v896 = vmax.f32 %v859, %v882
    %v897 = vmax.f32 %v860, %v883
    %v898 = vmax.f32 %v861, %v884
    %v899 = vmax.f32 %v862, %v885
    %v900 = vmax.f32 %v863, %v886
    %v901 = vmax.f32 %v864, %v887
    %903 = vrot.lane.b32.xlu0 %v895, 125
    %v904 = vpop.permute.xlu0 %903
    %v906 = vmax.f32 %v869, %v904
    %v907 = vlaneseq
    %v908 = vshrl.u32 %v907, 7
    %v909 = vsub.s32 4, %v908
    %v910 = vrot.slane %v609, %v909
    %v911 = vlaneseq
    %v912 = vshrl.u32 %v911, 7
    %v913 = vsub.s32 4, %v912
    %v914 = vrot.slane %v610, %v913
    %v915 = vlaneseq
    %v916 = vshrl.u32 %v915, 7
    %v917 = vsub.s32 4, %v916
    %v918 = vrot.slane %v611, %v917
    %v919 = vmul.f32 %v910, %v305
    %v920 = vmul.f32 %v914, %v306
    %v921 = vmul.f32 %v918, %v307
    %v922 = vsub.f32 %v910, %v305
    %v923 = vsub.f32 %v914, %v306
    %v924 = vsub.f32 %v918, %v307
    %v925 = vlaneseq
    %v926 = vshrl.u32 %v925, 7
    %v927 = vsub.s32 4, %v926
    %v928 = vrot.slane %v629, %v927
    %v929 = vmul.f32 %v618, %v928
    %v930 = vmax.f32 %v929, 1e-16
    %v931 = vrsqrt.pop %v930
    %v932 = vmul.f32 %v767, %v931
    %v933 = vmax.f32 %v896, %v919
    %v934 = vmax.f32 %v897, %v920
    %v935 = vmax.f32 %v898, %v921
    %v936 = vmax.f32 %v899, %v922
    %v937 = vmax.f32 %v900, %v923
    %v938 = vmax.f32 %v901, %v924
    %940 = vrot.lane.b32.xlu0 %v932, 124
    %v941 = vpop.permute.xlu0 %940
    %v943 = vmax.f32 %v906, %v941
    %v944 = vld [vmem:[%s4] sm:$0x77]
    %v945 = vld [vmem:[%s4 + $0x8] sm:$0x7]
    %v948 = vlaneseq
    %v949 = vshrl.u32 %v948, 7
    %v950 = vsub.s32 0, %v949
    %v951 = vrot.slane %v944, %v950
    %v952 = vlaneseq
    %v953 = vshrl.u32 %v952, 7
    %v954 = vsub.s32 4, %v953
    %v955 = vrot.slane %v944, %v954
    %v956 = vlaneseq
    %v957 = vshrl.u32 %v956, 7
    %v958 = vsub.s32 0, %v957
    %v959 = vrot.slane %v945, %v958
    %v963 = vlaneseq
    %v964 = vshrl.u32 %v963, 7
    %v965 = vsub.s32 0, %v964
    %v966 = vrot.slane %v951, %v965
    %v967 = vlaneseq
    %v968 = vshrl.u32 %v967, 7
    %v969 = vsub.s32 0, %v968
    %v970 = vrot.slane %v955, %v969
    %v971 = vlaneseq
    %v972 = vshrl.u32 %v971, 7
    %v973 = vsub.s32 0, %v972
    %v974 = vrot.slane %v959, %v973
    %v975 = vmul.f32 %v933, %v966
    %v976 = vmul.f32 %v934, %v970
    %v977 = vmul.f32 %v935, %v974
    %v978 = vlaneseq
    %v979 = vshrl.u32 %v978, 7
    %v980 = vsub.s32 1, %v979
    %v981 = vrot.slane %v944, %v980
    %v982 = vlaneseq
    %v983 = vshrl.u32 %v982, 7
    %v984 = vsub.s32 5, %v983
    %v985 = vrot.slane %v944, %v984
    %v986 = vlaneseq
    %v987 = vshrl.u32 %v986, 7
    %v988 = vsub.s32 1, %v987
    %v989 = vrot.slane %v945, %v988
    %v993 = vlaneseq
    %v994 = vshrl.u32 %v993, 7
    %v995 = vsub.s32 1, %v994
    %v996 = vrot.slane %v981, %v995
    %v997 = vlaneseq
    %v998 = vshrl.u32 %v997, 7
    %v999 = vsub.s32 1, %v998
    %v1000 = vrot.slane %v985, %v999
    %v1001 = vlaneseq
    %v1002 = vshrl.u32 %v1001, 7
    %v1003 = vsub.s32 1, %v1002
    %v1004 = vrot.slane %v989, %v1003
    %v1005 = vmul.f32 %v936, %v996
    %v1006 = vmul.f32 %v937, %v1000
    %v1007 = vmul.f32 %v938, %v1004
    %v1008 = vadd.f32 %v975, %v1005
    %v1009 = vadd.f32 %v976, %v1006
    %v1010 = vadd.f32 %v977, %v1007
    %v1011 = vlaneseq
    %v1012 = vshrl.u32 %v1011, 7
    %v1013 = vsub.s32 2, %v1012
    %v1014 = vrot.slane %v944, %v1013
    %v1015 = vlaneseq
    %v1016 = vshrl.u32 %v1015, 7
    %v1017 = vsub.s32 6, %v1016
    %v1018 = vrot.slane %v944, %v1017
    %v1019 = vlaneseq
    %v1020 = vshrl.u32 %v1019, 7
    %v1021 = vsub.s32 2, %v1020
    %v1022 = vrot.slane %v945, %v1021
    %v1026 = vlaneseq
    %v1027 = vshrl.u32 %v1026, 7
    %v1028 = vsub.s32 2, %v1027
    %v1029 = vrot.slane %v1014, %v1028
    %v1030 = vlaneseq
    %v1031 = vshrl.u32 %v1030, 7
    %v1032 = vsub.s32 2, %v1031
    %v1033 = vrot.slane %v1018, %v1032
    %v1034 = vlaneseq
    %v1035 = vshrl.u32 %v1034, 7
    %v1036 = vsub.s32 2, %v1035
    %v1037 = vrot.slane %v1022, %v1036
    %v1038 = vmul.f32 %v305, %v1029
    %v1039 = vmul.f32 %v306, %v1033
    %v1040 = vmul.f32 %v307, %v1037
    %v1041 = vadd.f32 %v1008, %v1038
    %v1042 = vadd.f32 %v1009, %v1039
    %v1043 = vadd.f32 %v1010, %v1040
    %v1044 = vadd.f32 %v1041, %v1042
    %v1045 = vadd.f32 %v1044, %v1043
    %1046 = vadd.xlane.f32.xlu0 %v1045
    %v1047 = vpop.xlane.xlu0 %1046
    %s1048 = sld [smem:[#allocation12]]
    %v1049 = vstv %s1048
    %v1050 = vmul.f32 %v943, %v1049
    %v1051 = vadd.f32 %v1047, %v1050
    %s1052 = sld [smem:[#allocation12 + $0x1]]
    %v1053 = vstv %s1052
    %v1054 = vadd.f32 %v1051, %v1053
    %vm1055 = vcmask 7168
    %1056 = vst.msk [vmem:[%s6] sm:$0xff] %vm1055, %v1054
    // Predicated region
    $region46: #{tpu_custom_call.1} parent=1 // pred_check
      _
    $region47: #{tpu_custom_call.1} parent=1 // pred_check_branch
      %1058 = sbr.rel (0) target = $region49
    $region48: #{tpu_custom_call.1} parent=1 // pred_region
      _
    $region49: #{tpu_custom_call.1} parent=1 // pred_fallthru
      _
    // Predicated region
    $region50: #{tpu_custom_call.1} parent=1 // pred_check
      _
    $region51: #{tpu_custom_call.1} parent=1 // pred_check_branch
      %1060 = sbr.rel (0) target = $region53
    $region52: #{tpu_custom_call.1} parent=1 // pred_region
      %s1062 = ssub.s32 128, 128
      %1063 = vsyncadd [#allocation5], %s1062
      %s1065 = sshll.u32 [#allocation13], 4
      %s1066 = int_to_ptr.vmem [resolvable:$true] %s1065
      %1068 = dma.vmem_to_hbm [thread:$0]  %s1066, 128, %s7, [#allocation5]
    $region53: #{tpu_custom_call.1} parent=1 // pred_fallthru
      _
    // Predicated region
    $region54: #{tpu_custom_call.1} parent=1 // pred_check
      _
    $region55: #{tpu_custom_call.1} parent=1 // pred_check_branch
      %1070 = sbr.rel (0) target = $region57
    $region56: #{tpu_custom_call.1} parent=1 // pred_region
      _
    $region57: #{tpu_custom_call.1} parent=1 // pred_fallthru
      _
    // Predicated region
    $region58: #{tpu_custom_call.1} parent=1 // pred_check
      _
    $region59: #{tpu_custom_call.1} parent=1 // pred_check_branch
      %1072 = sbr.rel (0) target = $region61
    $region60: #{tpu_custom_call.1} parent=1 // pred_region
      %1073 = dma.done [#allocation5], 128
    $region61: #{tpu_custom_call.1} parent=1 // pred_fallthru
      _
    %1074 = vsyncpa [#allocation4], 1
    %1075 = vsyncpa [#allocation8], 1
    %1076 = vsyncpa [#allocation11], 1
    %1077 = vsyncpa [#allocation5], 1
    %1078 = vsyncpa [#allocation6], 1

</llo_original>
